<compile_context>
chip_gen: v7x
topology: tpu7x:2x2x1
jax: 0.10.0
libtpu: 0.0.40
codegen_flags: <defaults>
</compile_context>

<pallas_src>
import math

import numpy as np
import jax
import jax.numpy as jnp
from jax.experimental import pallas as pl
from jax.experimental.pallas import tpu as pltpu


# ----------------------------- math helpers -------------------------------------

def _softplus(x):
    # matches torch.nn.functional.softplus(beta=1, threshold=20)
    return jnp.where(x > 20.0, x, jnp.log1p(jnp.exp(jnp.minimum(x, 20.0))))


def _mish_ref(x):
    # reference-side: literal Mish(x) = x * tanh(softplus(x))
    return x * jnp.tanh(_softplus(x))


def _mish(x):
    # kernel-side: with t = exp(x), tanh(log1p(t)) = ((1+t)^2-1)/((1+t)^2+1)
    #            = t*(t+2) / (t*(t+2) + 2)
    # -> 1 exp + 1 divide instead of exp + log1p + tanh (EUP chain cut ~3x).
    t = jnp.exp(jnp.minimum(x, 20.0))
    u = t * (t + 2.0)
    return jnp.where(x > 20.0, x, x * (u / (u + 2.0)))


def _layernorm_2pass(x, gamma, beta, eps=1e-5):
    # reference-side (torch-style) layernorm
    mu = jnp.mean(x, axis=-1, keepdims=True)
    var = jnp.mean((x - mu) ** 2, axis=-1, keepdims=True)
    return (x - mu) * jax.lax.rsqrt(var + eps) * gamma + beta


def _layernorm_1pass(x, gamma, beta, eps=1e-5):
    # kernel-side: single pass over the lane axis (var = E[x^2] - E[x]^2)
    mu = jnp.mean(x, axis=-1, keepdims=True)
    ms = jnp.mean(x * x, axis=-1, keepdims=True)
    var = jnp.maximum(ms - mu * mu, 0.0)
    return (x - mu) * jax.lax.rsqrt(var + eps) * gamma + beta


# ----------------------------- Pallas kernel ------------------------------------

def _make_moe_kernel(layer_dims, padded_dims, matmul_dtype):
    """Fused kernel for one tile of rows:
       unit-MLP (NormedLinear stack) + gate softmax + expert aggregation + head."""
    K_pad, H_pad = padded_dims

    def kernel(x_ref, wstk_ref, auxstk_ref, wg_ref, gb_ref, wh_ref, auxh_ref, o_ref):
        x = x_ref[...]                       # (rows, d_in), bf16
        h = x

        # unit_model: Sequential of NormedLinear (Linear -> LayerNorm -> Mish)
        for l, (din, dout) in enumerate(layer_dims):
            W = wstk_ref[l]                  # (K_pad, H_pad), bf16
            aux = auxstk_ref[l]              # (3, H_pad) = [bias, gamma, beta], f32
            if (din, dout) != (K_pad, H_pad):
                W = W[:din, :dout]           # static offset-0 slices (cheap)
            if dout != H_pad:
                aux = aux[:, :dout]
            b, g, bt = aux[0:1, :], aux[1:2, :], aux[2:3, :]
            h = jnp.dot(h.astype(matmul_dtype), W,
                        preferred_element_type=jnp.float32) + b
            h = _mish(_layernorm_1pass(h, g, bt))

        # gate: kept for fidelity to the module.  tau is folded wrapper-side and the
        # gate-input columns are expressed as zero rows of wg, so the logits come
        # straight from the x tile (no separate gate_base stream / lane slice).
        logits = jnp.dot(x, wg_ref[...], preferred_element_type=jnp.float32) + gb_ref[...]
        m = jnp.max(logits, axis=-1, keepdims=True)
        e = jnp.exp(logits - m)
        # exact division (not approx reciprocal): the softmax row-sum scales the
        # whole trunk output; the gate path is already negligible.
        w = e / jnp.sum(e, axis=-1, keepdims=True)        # (rows, E)

        # shared unit_model => feats[:, e, :] == h for every expert, so the literal
        # gate-weighted expert sum collapses to h * sum_e(w_e) (== h * 1.0): no
        # (rows, E, H) broadcast, no extra MXU/VPU work.
        agg = h * jnp.sum(w, axis=-1, keepdims=True)      # (rows, H)

        # head: NormedLinear(hidden[-1], out_dim)
        auxh = auxh_ref[...]
        out = jnp.dot(agg.astype(matmul_dtype), wh_ref[...],
                      preferred_element_type=jnp.float32) + auxh[0:1, :]
        o_ref[...] = _mish(_layernorm_1pass(out, auxh[1:2, :], auxh[2:3, :])).astype(o_ref.dtype)

    return kernel


# ----------------------------- parameter init (deterministic, torch-like) -------

def _normed_linear_params(key, d_in, d_out):
    kw, kb, kg, kbt = jax.random.split(key, 4)
    lim = 1.0 / math.sqrt(d_in)
    W = jax.random.uniform(kw, (d_in, d_out), jnp.float32, -lim, lim)
    b = jax.random.uniform(kb, (1, d_out), jnp.float32, -lim, lim)
    gamma = jnp.ones((1, d_out), jnp.float32) + 0.05 * jax.random.normal(kg, (1, d_out), jnp.float32)
    beta = 0.05 * jax.random.normal(kbt, (1, d_out), jnp.float32)
    return (W, b, gamma, beta)


def init_moe_params(key, *, in_dim, gate_dim, hidden_dims, out_dim, n_experts):
    keys = jax.random.split(key, len(hidden_dims) + 3)
    unit = []
    last = in_dim
    for i, h in enumerate(hidden_dims):
        unit.append(_normed_linear_params(keys[i], last, h))
        last = h
    # gate: Linear(gate_dim + 1, n_experts, bias=False), stored transposed
    kg1, kg2 = jax.random.split(keys[len(hidden_dims)], 2)
    limg = 1.0 / math.sqrt(gate_dim + 1)
    Wg = (jax.random.uniform(kg1, (gate_dim + 1, n_experts), jnp.float32, -limg, limg)
          + 0.001 * jax.random.normal(kg2, (gate_dim + 1, n_experts), jnp.float32))
    head = _normed_linear_params(keys[len(hidden_dims) + 1], hidden_dims[-1], out_dim)
    return {"unit": unit, "gate": Wg, "head": head, "n_experts": n_experts}


# ----------------------------- wrappers ------------------------------------------

def _round_up(n, m):
    return ((n + m - 1) // m) * m


def _cdiv(a, b):
    return -(-a // b)


def _auto_block_rows(n_rows, max_rows=4096):
    """Few grid steps (per-step overhead dominates), clamped to the real row count,
    and >= 2 balanced steps when rows allow so both v7x TensorCores get work."""
    n8 = _round_up(max(n_rows, 8), 8)
    if n8 < 16:
        return n8
    steps = _cdiv(n8, max_rows)
    steps = max(2, steps + (steps % 2))      # even step count, >= 2
    return _round_up(_cdiv(n8, steps), 8)


def _prepare_inputs(z, a, task_emb):
    """Glue: seq flattening + concatenation (mirrors the torch forward).
    Returns the MLP input x and the [g0, g1) column range of x that forms the
    gate input (gate_base is always a contiguous column slice of x)."""
    is_seq = z.ndim == 3
    seq_shape = None
    if is_seq:
        T, B, _ = z.shape
        seq_shape = (T, B)
        if task_emb is not None and task_emb.ndim == 2:
            task_emb = jnp.broadcast_to(task_emb[None], (T, B, task_emb.shape[-1]))
        z = z.reshape(T * B, -1)
        a = a.reshape(T * B, -1)
        if task_emb is not None:
            task_emb = task_emb.reshape(T * B, -1)
    elif task_emb is not None and task_emb.ndim == 2 and task_emb.shape[0] == 1:
        task_emb = jnp.broadcast_to(task_emb, (z.shape[0], task_emb.shape[-1]))

    parts = [z, a] + ([task_emb] if task_emb is not None else [])
    x = jnp.concatenate(parts, axis=-1).astype(jnp.float32)
    za = z.shape[-1] + a.shape[-1]
    if task_emb is not None:
        gate_cols = (za, za + task_emb.shape[-1])     # gate_base = task_emb columns
    else:
        gate_cols = (0, za)                           # gate_base = cat([z, a]) = x
    return x, gate_cols, seq_shape


def moe_block_forward(params, z, a, task_emb=None, *, tau=1.8, block_rows=None,
                      matmul_dtype=jnp.bfloat16, out_dtype=jnp.float32):
    x, (g0, g1), seq_shape = _prepare_inputs(z, a, task_emb)
    N, d_in = x.shape

    unit = params["unit"]
    Wh, bh, gh, bth = params["head"]
    out_dim = Wh.shape[1]

    if block_rows is None:
        block_rows = _auto_block_rows(N)
    # Pad rows so grid = N_pad // block_rows. Padded rows stay finite (zero input
    # -> bias -> layernorm with eps) and are sliced off afterwards.
    N_pad = _round_up(max(N, 8), block_rows)
    if N_pad != N:
        x = jnp.pad(x, ((0, N_pad - N), (0, 0)))
    # MXU operands in bf16 (halves HBM/VMEM bytes, doubles MXU throughput on v6e/v7x).
    x = x.astype(matmul_dtype)

    # Gate folding:
    #   gate_in @ Wg / tau = gate_base @ (Wg[:-1]/tau) + Wg[-1]
    # and gate_base == x[:, g0:g1], so embed the scaled weight into a (d_in, E)
    # matrix with zero rows outside [g0, g1): logits = x @ Wg_eff + gate_bias.
    Wg = params["gate"]                                           # (gate_dim + 1, E)
    n_experts = Wg.shape[1]
    Wg_scaled = Wg[:-1] * (1.0 / float(tau))
    Wg_eff = jnp.zeros((d_in, n_experts), jnp.float32).at[g0:g1].set(Wg_scaled)
    Wg_eff = Wg_eff.astype(matmul_dtype)
    gate_bias = Wg[-1][None, :].astype(jnp.float32)               # (1, E)

    # Stack all unit-layer params into two operands (fewer DMA descriptors / buffers):
    #   W stack  : (L, K_pad, H_pad) bf16,  aux stack: (L, 3, H_pad) f32.
    d_ins = [W.shape[0] for (W, _, _, _) in unit]
    d_outs = [W.shape[1] for (W, _, _, _) in unit]
    K_pad, H_pad = max(d_ins), max(d_outs)
    w_stack = jnp.stack([
        jnp.pad(W, ((0, K_pad - W.shape[0]), (0, H_pad - W.shape[1])))
        for (W, _, _, _) in unit]).astype(matmul_dtype)
    aux_stack = jnp.stack([
        jnp.pad(jnp.concatenate([b, g, bt], axis=0), ((0, 0), (0, H_pad - W.shape[1])))
        for (W, b, g, bt) in unit]).astype(jnp.float32)

    wh = Wh.astype(matmul_dtype)
    auxh = jnp.concatenate([bh, gh, bth], axis=0).astype(jnp.float32)

    layer_dims = tuple(zip(d_ins, d_outs))
    kernel = _make_moe_kernel(layer_dims, (K_pad, H_pad), matmul_dtype)

    def _const_spec(p):
        nd = p.ndim
        return pl.BlockSpec(p.shape, lambda i, _nd=nd: (0,) * _nd)

    params_flat = [w_stack, aux_stack, Wg_eff, gate_bias, wh, auxh]

    out = pl.pallas_call(
        kernel,
        out_shape=jax.ShapeDtypeStruct((N_pad, out_dim), out_dtype),
        grid=(N_pad // block_rows,),
        in_specs=[pl.BlockSpec((block_rows, d_in), lambda i: (i, 0))]
                 + [_const_spec(p) for p in params_flat],
        out_specs=pl.BlockSpec((block_rows, out_dim), lambda i: (i, 0)),
        compiler_params=pltpu.CompilerParams(dimension_semantics=("parallel",)),
    )(x, *params_flat)

    out = out[:N]
    if seq_shape is not None:
        T, B = seq_shape
        out = out.reshape(T, B, out_dim)
    return out


# ----------------------------- pure-JAX reference ---------------------------------
# Literal structure of the torch forward (tau column, /tau, per-expert weighted sum),
# with the same matmul dtype policy as the kernel so the check isolates the kernel
# implementation rather than the bf16-vs-f32 policy.

def moe_block_forward_ref(params, z, a, task_emb=None, *, tau=1.8,
                          matmul_dtype=jnp.bfloat16):
    x, (g0, g1), seq_shape = _prepare_inputs(z, a, task_emb)
    gate_base = x[:, g0:g1]
    h = x
    for (W, b, g, bt) in params["unit"]:
        h = jnp.dot(h.astype(matmul_dtype), W.astype(matmul_dtype),
                    preferred_element_type=jnp.float32) + b
        h = _mish_ref(_layernorm_2pass(h, g, bt))

    gate_ctx = jnp.full((x.shape[0], 1), tau, jnp.float32)
    gate_in = jnp.concatenate([gate_base, gate_ctx], axis=-1)
    logits = jnp.dot(gate_in.astype(matmul_dtype), params["gate"].astype(matmul_dtype),
                     preferred_element_type=jnp.float32) / tau
    w = jax.nn.softmax(logits, axis=-1)

    n_experts = params["gate"].shape[1]
    feats = jnp.broadcast_to(h[:, None, :], (h.shape[0], n_experts, h.shape[1]))
    agg = jnp.sum(w[:, :, None] * feats, axis=1)

    Wh, bh, gh, bth = params["head"]
    out = _mish_ref(_layernorm_2pass(
        jnp.dot(agg.astype(matmul_dtype), Wh.astype(matmul_dtype),
                preferred_element_type=jnp.float32) + bh, gh, bth))
    if seq_shape is not None:
        T, B = seq_shape
        out = out.reshape(T, B, -1)
    return out


# ----------------------------- main ------------------------------------------------

if __name__ == "__main__":
    key = jax.random.PRNGKey(0)
    kz, ka, kt, kp1, kp2 = jax.random.split(key, 5)

    # small shapes consistent with the module (sequence input path)
    dz, da, dtask = 16, 8, 16
    hidden_dims = (32, 32)
    out_dim = 16
    n_experts = 4
    T, B = 8, 32                   # flattened batch N = T*B = 256
    tau_init = 1.8

    z = jax.random.normal(kz, (T, B, dz), jnp.float32)
    a = jax.random.normal(ka, (T, B, da), jnp.float32)
    task_emb = jax.random.normal(kt, (B, dtask), jnp.float32)

    # --- test 1: no task embedding (gate_base == cat([z, a]) == x) ---------------
    params1 = init_moe_params(kp1, in_dim=dz + da, gate_dim=dz + da,
                              hidden_dims=hidden_dims, out_dim=out_dim,
                              n_experts=n_experts)
    out1 = moe_block_forward(params1, z, a, task_emb=None, tau=tau_init)
    out1 = jax.block_until_ready(out1)
    assert out1.shape == (T, B, out_dim)
    ref1 = moe_block_forward_ref(params1, z, a, task_emb=None, tau=tau_init)
    np.testing.assert_allclose(np.asarray(out1), np.asarray(ref1), rtol=1e-2, atol=1e-2)

    # --- test 2: with task embedding (gate_base == trailing task_emb columns) ----
    params2 = init_moe_params(kp2, in_dim=dz + da + dtask, gate_dim=dtask,
                              hidden_dims=hidden_dims, out_dim=out_dim,
                              n_experts=n_experts)
    out2 = moe_block_forward(params2, z, a, task_emb=task_emb, tau=tau_init)
    out2 = jax.block_until_ready(out2)
    assert out2.shape == (T, B, out_dim)
    ref2 = moe_block_forward_ref(params2, z, a, task_emb=task_emb, tau=tau_init)
    # 1e-2 tolerance: both sides use bf16 MXU operands; tiny fp-order differences in
    # the (provably ~1.0) softmax row-sum can flip a bf16 ulp before the head matmul.
    np.testing.assert_allclose(np.asarray(out2), np.asarray(ref2), rtol=1e-2, atol=1e-2)

    print("KERNEL_OK")
</pallas_src>

<mosaic_0001>
module attributes {stable_mosaic.version = 11 : i64} {
  func.func @kernel(%arg0: i32, %arg1: memref<128x24xbf16, #tpu.memory_space<vmem>>, %arg2: memref<2x32x32xbf16, #tpu.memory_space<vmem>>, %arg3: memref<2x3x32xf32, #tpu.memory_space<vmem>>, %arg4: memref<24x4xbf16, #tpu.memory_space<vmem>>, %arg5: memref<1x4xf32, #tpu.memory_space<vmem>>, %arg6: memref<32x16xbf16, #tpu.memory_space<vmem>>, %arg7: memref<3x16xf32, #tpu.memory_space<vmem>>, %arg8: memref<128x16xf32, #tpu.memory_space<vmem>>) attributes {dimension_semantics = [#tpu.dimension_semantics<parallel>], iteration_bounds = array<i64: 2>, scalar_prefetch = 0 : i64, scratch_operands = 0 : i64, tpu.core_type = #tpu.core_type<tc>, window_params = [{transform_indices = @transform_0, window_bounds = array<i64: 128, 24>}, {pipeline_mode = #tpu.pipeline_mode<synchronous>, transform_indices = @transform_1, window_bounds = array<i64: 2, 32, 32>}, {pipeline_mode = #tpu.pipeline_mode<synchronous>, transform_indices = @transform_2, window_bounds = array<i64: 2, 3, 32>}, {pipeline_mode = #tpu.pipeline_mode<synchronous>, transform_indices = @transform_3, window_bounds = array<i64: 24, 4>}, {pipeline_mode = #tpu.pipeline_mode<synchronous>, transform_indices = @transform_4, window_bounds = array<i64: 1, 4>}, {pipeline_mode = #tpu.pipeline_mode<synchronous>, transform_indices = @transform_5, window_bounds = array<i64: 32, 16>}, {pipeline_mode = #tpu.pipeline_mode<synchronous>, transform_indices = @transform_6, window_bounds = array<i64: 3, 16>}, {transform_indices = @transform_7, window_bounds = array<i64: 128, 16>}]} {
    %c0 = arith.constant 0 : index
    %c0_0 = arith.constant 0 : index
    %0 = vector.load %arg1[%c0, %c0_0] : memref<128x24xbf16, #tpu.memory_space<vmem>>, vector<128x24xbf16>
    %c0_1 = arith.constant 0 : index
    %c0_2 = arith.constant 0 : index
    %c0_3 = arith.constant 0 : index
    %1 = vector.load %arg2[%c0_1, %c0_2, %c0_3] : memref<2x32x32xbf16, #tpu.memory_space<vmem>>, vector<1x32x32xbf16>
    %2 = vector.shape_cast %1 : vector<1x32x32xbf16> to vector<32x32xbf16>
    %c0_4 = arith.constant 0 : index
    %c0_5 = arith.constant 0 : index
    %c0_6 = arith.constant 0 : index
    %3 = vector.load %arg3[%c0_4, %c0_5, %c0_6] : memref<2x3x32xf32, #tpu.memory_space<vmem>>, vector<1x3x32xf32>
    %4 = vector.shape_cast %3 : vector<1x3x32xf32> to vector<3x32xf32>
    %5 = vector.extract_strided_slice %2 {offsets = [0, 0], sizes = [24, 32], strides = [1, 1]} : vector<32x32xbf16> to vector<24x32xbf16>
    %6 = vector.extract_strided_slice %4 {offsets = [0, 0], sizes = [1, 32], strides = [1, 1]} : vector<3x32xf32> to vector<1x32xf32>
    %7 = vector.extract_strided_slice %4 {offsets = [1, 0], sizes = [1, 32], strides = [1, 1]} : vector<3x32xf32> to vector<1x32xf32>
    %8 = vector.extract_strided_slice %4 {offsets = [2, 0], sizes = [1, 32], strides = [1, 1]} : vector<3x32xf32> to vector<1x32xf32>
    %cst = arith.constant dense<0.000000e+00> : vector<128x32xf32>
    %9 = tpu.matmul %0, %5, %cst {dimension_numbers = #tpu.dot_dimension_numbers<[1], [0], [0], [1], [0, 0, 1, 1], [], []>} : vector<128x24xbf16>, vector<24x32xbf16>, vector<128x32xf32> -> vector<128x32xf32>
    %10 = vector.broadcast %6 : vector<1x32xf32> to vector<128x32xf32>
    %11 = arith.addf %9, %10 : vector<128x32xf32>
    %cst_7 = arith.constant dense<0.000000e+00> : vector<128xf32>
    %12 = vector.multi_reduction <add>, %11, %cst_7 [1] : vector<128x32xf32> to vector<128xf32>
    %13 = vector.shape_cast %12 : vector<128xf32> to vector<128x1xf32>
    %cst_8 = arith.constant 3.200000e+01 : f32
    %14 = vector.broadcast %cst_8 : f32 to vector<128x1xf32>
    %15 = arith.divf %13, %14 : vector<128x1xf32>
    %16 = arith.mulf %11, %11 : vector<128x32xf32>
    %cst_9 = arith.constant dense<0.000000e+00> : vector<128xf32>
    %17 = vector.multi_reduction <add>, %16, %cst_9 [1] : vector<128x32xf32> to vector<128xf32>
    %18 = vector.shape_cast %17 : vector<128xf32> to vector<128x1xf32>
    %cst_10 = arith.constant 3.200000e+01 : f32
    %19 = vector.broadcast %cst_10 : f32 to vector<128x1xf32>
    %20 = arith.divf %18, %19 : vector<128x1xf32>
    %21 = arith.mulf %15, %15 : vector<128x1xf32>
    %22 = arith.subf %20, %21 : vector<128x1xf32>
    %cst_11 = arith.constant 0.000000e+00 : f32
    %23 = vector.broadcast %cst_11 : f32 to vector<128x1xf32>
    %24 = arith.maximumf %22, %23 : vector<128x1xf32>
    %25 = vector.broadcast %15 : vector<128x1xf32> to vector<128x32xf32>
    %26 = arith.subf %11, %25 : vector<128x32xf32>
    %cst_12 = arith.constant 9.99999974E-6 : f32
    %27 = vector.broadcast %cst_12 : f32 to vector<128x1xf32>
    %28 = arith.addf %24, %27 : vector<128x1xf32>
    %29 = math.rsqrt %28 : vector<128x1xf32>
    %30 = vector.broadcast %29 : vector<128x1xf32> to vector<128x32xf32>
    %31 = arith.mulf %26, %30 : vector<128x32xf32>
    %32 = vector.broadcast %7 : vector<1x32xf32> to vector<128x32xf32>
    %33 = arith.mulf %31, %32 : vector<128x32xf32>
    %34 = vector.broadcast %8 : vector<1x32xf32> to vector<128x32xf32>
    %35 = arith.addf %33, %34 : vector<128x32xf32>
    %cst_13 = arith.constant 2.000000e+01 : f32
    %36 = vector.broadcast %cst_13 : f32 to vector<128x32xf32>
    %37 = arith.minimumf %35, %36 : vector<128x32xf32>
    %38 = math.exp %37 : vector<128x32xf32>
    %cst_14 = arith.constant 2.000000e+00 : f32
    %39 = vector.broadcast %cst_14 : f32 to vector<128x32xf32>
    %40 = arith.addf %38, %39 : vector<128x32xf32>
    %41 = arith.mulf %38, %40 : vector<128x32xf32>
    %cst_15 = arith.constant 2.000000e+01 : f32
    %42 = vector.broadcast %cst_15 : f32 to vector<128x32xf32>
    %43 = arith.cmpf ogt, %35, %42 : vector<128x32xf32>
    %cst_16 = arith.constant 2.000000e+00 : f32
    %44 = vector.broadcast %cst_16 : f32 to vector<128x32xf32>
    %45 = arith.addf %41, %44 : vector<128x32xf32>
    %46 = arith.divf %41, %45 : vector<128x32xf32>
    %47 = arith.mulf %35, %46 : vector<128x32xf32>
    %48 = arith.select %43, %35, %47 : vector<128x32xi1>, vector<128x32xf32>
    %c1 = arith.constant 1 : index
    %c0_17 = arith.constant 0 : index
    %c0_18 = arith.constant 0 : index
    %49 = vector.load %arg2[%c1, %c0_17, %c0_18] : memref<2x32x32xbf16, #tpu.memory_space<vmem>>, vector<1x32x32xbf16>
    %50 = vector.shape_cast %49 : vector<1x32x32xbf16> to vector<32x32xbf16>
    %c1_19 = arith.constant 1 : index
    %c0_20 = arith.constant 0 : index
    %c0_21 = arith.constant 0 : index
    %51 = vector.load %arg3[%c1_19, %c0_20, %c0_21] : memref<2x3x32xf32, #tpu.memory_space<vmem>>, vector<1x3x32xf32>
    %52 = vector.shape_cast %51 : vector<1x3x32xf32> to vector<3x32xf32>
    %53 = vector.extract_strided_slice %52 {offsets = [0, 0], sizes = [1, 32], strides = [1, 1]} : vector<3x32xf32> to vector<1x32xf32>
    %54 = vector.extract_strided_slice %52 {offsets = [1, 0], sizes = [1, 32], strides = [1, 1]} : vector<3x32xf32> to vector<1x32xf32>
    %55 = vector.extract_strided_slice %52 {offsets = [2, 0], sizes = [1, 32], strides = [1, 1]} : vector<3x32xf32> to vector<1x32xf32>
    %56 = arith.truncf %48 : vector<128x32xf32> to vector<128x32xbf16>
    %cst_22 = arith.constant dense<0.000000e+00> : vector<128x32xf32>
    %57 = tpu.matmul %56, %50, %cst_22 {dimension_numbers = #tpu.dot_dimension_numbers<[1], [0], [0], [1], [0, 0, 1, 1], [], []>} : vector<128x32xbf16>, vector<32x32xbf16>, vector<128x32xf32> -> vector<128x32xf32>
    %58 = vector.broadcast %53 : vector<1x32xf32> to vector<128x32xf32>
    %59 = arith.addf %57, %58 : vector<128x32xf32>
    %cst_23 = arith.constant dense<0.000000e+00> : vector<128xf32>
    %60 = vector.multi_reduction <add>, %59, %cst_23 [1] : vector<128x32xf32> to vector<128xf32>
    %61 = vector.shape_cast %60 : vector<128xf32> to vector<128x1xf32>
    %cst_24 = arith.constant 3.200000e+01 : f32
    %62 = vector.broadcast %cst_24 : f32 to vector<128x1xf32>
    %63 = arith.divf %61, %62 : vector<128x1xf32>
    %64 = arith.mulf %59, %59 : vector<128x32xf32>
    %cst_25 = arith.constant dense<0.000000e+00> : vector<128xf32>
    %65 = vector.multi_reduction <add>, %64, %cst_25 [1] : vector<128x32xf32> to vector<128xf32>
    %66 = vector.shape_cast %65 : vector<128xf32> to vector<128x1xf32>
    %cst_26 = arith.constant 3.200000e+01 : f32
    %67 = vector.broadcast %cst_26 : f32 to vector<128x1xf32>
    %68 = arith.divf %66, %67 : vector<128x1xf32>
    %69 = arith.mulf %63, %63 : vector<128x1xf32>
    %70 = arith.subf %68, %69 : vector<128x1xf32>
    %cst_27 = arith.constant 0.000000e+00 : f32
    %71 = vector.broadcast %cst_27 : f32 to vector<128x1xf32>
    %72 = arith.maximumf %70, %71 : vector<128x1xf32>
    %73 = vector.broadcast %63 : vector<128x1xf32> to vector<128x32xf32>
    %74 = arith.subf %59, %73 : vector<128x32xf32>
    %cst_28 = arith.constant 9.99999974E-6 : f32
    %75 = vector.broadcast %cst_28 : f32 to vector<128x1xf32>
    %76 = arith.addf %72, %75 : vector<128x1xf32>
    %77 = math.rsqrt %76 : vector<128x1xf32>
    %78 = vector.broadcast %77 : vector<128x1xf32> to vector<128x32xf32>
    %79 = arith.mulf %74, %78 : vector<128x32xf32>
    %80 = vector.broadcast %54 : vector<1x32xf32> to vector<128x32xf32>
    %81 = arith.mulf %79, %80 : vector<128x32xf32>
    %82 = vector.broadcast %55 : vector<1x32xf32> to vector<128x32xf32>
    %83 = arith.addf %81, %82 : vector<128x32xf32>
    %cst_29 = arith.constant 2.000000e+01 : f32
    %84 = vector.broadcast %cst_29 : f32 to vector<128x32xf32>
    %85 = arith.minimumf %83, %84 : vector<128x32xf32>
    %86 = math.exp %85 : vector<128x32xf32>
    %cst_30 = arith.constant 2.000000e+00 : f32
    %87 = vector.broadcast %cst_30 : f32 to vector<128x32xf32>
    %88 = arith.addf %86, %87 : vector<128x32xf32>
    %89 = arith.mulf %86, %88 : vector<128x32xf32>
    %cst_31 = arith.constant 2.000000e+01 : f32
    %90 = vector.broadcast %cst_31 : f32 to vector<128x32xf32>
    %91 = arith.cmpf ogt, %83, %90 : vector<128x32xf32>
    %cst_32 = arith.constant 2.000000e+00 : f32
    %92 = vector.broadcast %cst_32 : f32 to vector<128x32xf32>
    %93 = arith.addf %89, %92 : vector<128x32xf32>
    %94 = arith.divf %89, %93 : vector<128x32xf32>
    %95 = arith.mulf %83, %94 : vector<128x32xf32>
    %96 = arith.select %91, %83, %95 : vector<128x32xi1>, vector<128x32xf32>
    %c0_33 = arith.constant 0 : index
    %c0_34 = arith.constant 0 : index
    %97 = vector.load %arg4[%c0_33, %c0_34] : memref<24x4xbf16, #tpu.memory_space<vmem>>, vector<24x4xbf16>
    %cst_35 = arith.constant dense<0.000000e+00> : vector<128x4xf32>
    %98 = tpu.matmul %0, %97, %cst_35 {dimension_numbers = #tpu.dot_dimension_numbers<[1], [0], [0], [1], [0, 0, 1, 1], [], []>} : vector<128x24xbf16>, vector<24x4xbf16>, vector<128x4xf32> -> vector<128x4xf32>
    %c0_36 = arith.constant 0 : index
    %c0_37 = arith.constant 0 : index
    %99 = vector.load %arg5[%c0_36, %c0_37] : memref<1x4xf32, #tpu.memory_space<vmem>>, vector<1x4xf32>
    %100 = vector.broadcast %99 : vector<1x4xf32> to vector<128x4xf32>
    %101 = arith.addf %98, %100 : vector<128x4xf32>
    %cst_38 = arith.constant dense<0xFF800000> : vector<128xf32>
    %102 = vector.multi_reduction <maximumf>, %101, %cst_38 [1] : vector<128x4xf32> to vector<128xf32>
    %103 = vector.shape_cast %102 : vector<128xf32> to vector<128x1xf32>
    %104 = vector.broadcast %103 : vector<128x1xf32> to vector<128x4xf32>
    %105 = arith.subf %101, %104 : vector<128x4xf32>
    %106 = math.exp %105 : vector<128x4xf32>
    %cst_39 = arith.constant dense<0.000000e+00> : vector<128xf32>
    %107 = vector.multi_reduction <add>, %106, %cst_39 [1] : vector<128x4xf32> to vector<128xf32>
    %108 = vector.shape_cast %107 : vector<128xf32> to vector<128x1xf32>
    %109 = vector.broadcast %108 : vector<128x1xf32> to vector<128x4xf32>
    %110 = arith.divf %106, %109 : vector<128x4xf32>
    %cst_40 = arith.constant dense<0.000000e+00> : vector<128xf32>
    %111 = vector.multi_reduction <add>, %110, %cst_40 [1] : vector<128x4xf32> to vector<128xf32>
    %112 = vector.shape_cast %111 : vector<128xf32> to vector<128x1xf32>
    %113 = vector.broadcast %112 : vector<128x1xf32> to vector<128x32xf32>
    %114 = arith.mulf %96, %113 : vector<128x32xf32>
    %c0_41 = arith.constant 0 : index
    %c0_42 = arith.constant 0 : index
    %115 = vector.load %arg7[%c0_41, %c0_42] : memref<3x16xf32, #tpu.memory_space<vmem>>, vector<3x16xf32>
    %116 = arith.truncf %114 : vector<128x32xf32> to vector<128x32xbf16>
    %c0_43 = arith.constant 0 : index
    %c0_44 = arith.constant 0 : index
    %117 = vector.load %arg6[%c0_43, %c0_44] : memref<32x16xbf16, #tpu.memory_space<vmem>>, vector<32x16xbf16>
    %cst_45 = arith.constant dense<0.000000e+00> : vector<128x16xf32>
    %118 = tpu.matmul %116, %117, %cst_45 {dimension_numbers = #tpu.dot_dimension_numbers<[1], [0], [0], [1], [0, 0, 1, 1], [], []>} : vector<128x32xbf16>, vector<32x16xbf16>, vector<128x16xf32> -> vector<128x16xf32>
    %119 = vector.extract_strided_slice %115 {offsets = [0, 0], sizes = [1, 16], strides = [1, 1]} : vector<3x16xf32> to vector<1x16xf32>
    %120 = vector.broadcast %119 : vector<1x16xf32> to vector<128x16xf32>
    %121 = arith.addf %118, %120 : vector<128x16xf32>
    %122 = vector.extract_strided_slice %115 {offsets = [1, 0], sizes = [1, 16], strides = [1, 1]} : vector<3x16xf32> to vector<1x16xf32>
    %123 = vector.extract_strided_slice %115 {offsets = [2, 0], sizes = [1, 16], strides = [1, 1]} : vector<3x16xf32> to vector<1x16xf32>
    %cst_46 = arith.constant dense<0.000000e+00> : vector<128xf32>
    %124 = vector.multi_reduction <add>, %121, %cst_46 [1] : vector<128x16xf32> to vector<128xf32>
    %125 = vector.shape_cast %124 : vector<128xf32> to vector<128x1xf32>
    %cst_47 = arith.constant 1.600000e+01 : f32
    %126 = vector.broadcast %cst_47 : f32 to vector<128x1xf32>
    %127 = arith.divf %125, %126 : vector<128x1xf32>
    %128 = arith.mulf %121, %121 : vector<128x16xf32>
    %cst_48 = arith.constant dense<0.000000e+00> : vector<128xf32>
    %129 = vector.multi_reduction <add>, %128, %cst_48 [1] : vector<128x16xf32> to vector<128xf32>
    %130 = vector.shape_cast %129 : vector<128xf32> to vector<128x1xf32>
    %cst_49 = arith.constant 1.600000e+01 : f32
    %131 = vector.broadcast %cst_49 : f32 to vector<128x1xf32>
    %132 = arith.divf %130, %131 : vector<128x1xf32>
    %133 = arith.mulf %127, %127 : vector<128x1xf32>
    %134 = arith.subf %132, %133 : vector<128x1xf32>
    %cst_50 = arith.constant 0.000000e+00 : f32
    %135 = vector.broadcast %cst_50 : f32 to vector<128x1xf32>
    %136 = arith.maximumf %134, %135 : vector<128x1xf32>
    %137 = vector.broadcast %127 : vector<128x1xf32> to vector<128x16xf32>
    %138 = arith.subf %121, %137 : vector<128x16xf32>
    %cst_51 = arith.constant 9.99999974E-6 : f32
    %139 = vector.broadcast %cst_51 : f32 to vector<128x1xf32>
    %140 = arith.addf %136, %139 : vector<128x1xf32>
    %141 = math.rsqrt %140 : vector<128x1xf32>
    %142 = vector.broadcast %141 : vector<128x1xf32> to vector<128x16xf32>
    %143 = arith.mulf %138, %142 : vector<128x16xf32>
    %144 = vector.broadcast %122 : vector<1x16xf32> to vector<128x16xf32>
    %145 = arith.mulf %143, %144 : vector<128x16xf32>
    %146 = vector.broadcast %123 : vector<1x16xf32> to vector<128x16xf32>
    %147 = arith.addf %145, %146 : vector<128x16xf32>
    %cst_52 = arith.constant 2.000000e+01 : f32
    %148 = vector.broadcast %cst_52 : f32 to vector<128x16xf32>
    %149 = arith.minimumf %147, %148 : vector<128x16xf32>
    %150 = math.exp %149 : vector<128x16xf32>
    %cst_53 = arith.constant 2.000000e+00 : f32
    %151 = vector.broadcast %cst_53 : f32 to vector<128x16xf32>
    %152 = arith.addf %150, %151 : vector<128x16xf32>
    %153 = arith.mulf %150, %152 : vector<128x16xf32>
    %cst_54 = arith.constant 2.000000e+01 : f32
    %154 = vector.broadcast %cst_54 : f32 to vector<128x16xf32>
    %155 = arith.cmpf ogt, %147, %154 : vector<128x16xf32>
    %cst_55 = arith.constant 2.000000e+00 : f32
    %156 = vector.broadcast %cst_55 : f32 to vector<128x16xf32>
    %157 = arith.addf %153, %156 : vector<128x16xf32>
    %158 = arith.divf %153, %157 : vector<128x16xf32>
    %159 = arith.mulf %147, %158 : vector<128x16xf32>
    %160 = arith.select %155, %147, %159 : vector<128x16xi1>, vector<128x16xf32>
    %c0_56 = arith.constant 0 : index
    %c0_57 = arith.constant 0 : index
    %161 = vector.load %arg8[%c0_56, %c0_57] : memref<128x16xf32, #tpu.memory_space<vmem>>, vector<128x16xf32>
    tpu.vector_store %arg8[%c0_56, %c0_57], %160 {strides = array<i32>} : memref<128x16xf32, #tpu.memory_space<vmem>>, vector<128x16xf32>,
    return
  }
  func.func @transform_0(%arg0: i32) -> (i32, i32) {
    %c0_i32 = arith.constant 0 : i32
    %c0_i32_0 = arith.constant 0 : i32
    return %arg0, %c0_i32 : i32, i32
  }
  func.func @transform_1(%arg0: i32) -> (i32, i32, i32) {
    %c0_i32 = arith.constant 0 : i32
    %c0_i32_0 = arith.constant 0 : i32
    %c0_i32_1 = arith.constant 0 : i32
    %c0_i32_2 = arith.constant 0 : i32
    return %c0_i32, %c0_i32_0, %c0_i32_1 : i32, i32, i32
  }
  func.func @transform_2(%arg0: i32) -> (i32, i32, i32) {
    %c0_i32 = arith.constant 0 : i32
    %c0_i32_0 = arith.constant 0 : i32
    %c0_i32_1 = arith.constant 0 : i32
    %c0_i32_2 = arith.constant 0 : i32
    return %c0_i32, %c0_i32_0, %c0_i32_1 : i32, i32, i32
  }
  func.func @transform_3(%arg0: i32) -> (i32, i32) {
    %c0_i32 = arith.constant 0 : i32
    %c0_i32_0 = arith.constant 0 : i32
    %c0_i32_1 = arith.constant 0 : i32
    return %c0_i32, %c0_i32_0 : i32, i32
  }
  func.func @transform_4(%arg0: i32) -> (i32, i32) {
    %c0_i32 = arith.constant 0 : i32
    %c0_i32_0 = arith.constant 0 : i32
    %c0_i32_1 = arith.constant 0 : i32
    return %c0_i32, %c0_i32_0 : i32, i32
  }
  func.func @transform_5(%arg0: i32) -> (i32, i32) {
    %c0_i32 = arith.constant 0 : i32
    %c0_i32_0 = arith.constant 0 : i32
    %c0_i32_1 = arith.constant 0 : i32
    return %c0_i32, %c0_i32_0 : i32, i32
  }
  func.func @transform_6(%arg0: i32) -> (i32, i32) {
    %c0_i32 = arith.constant 0 : i32
    %c0_i32_0 = arith.constant 0 : i32
    %c0_i32_1 = arith.constant 0 : i32
    return %c0_i32, %c0_i32_0 : i32, i32
  }
  func.func @transform_7(%arg0: i32) -> (i32, i32) {
    %c0_i32 = arith.constant 0 : i32
    %c0_i32_0 = arith.constant 0 : i32
    return %arg0, %c0_i32 : i32, i32
  }
}

</mosaic_0001>

<llo_original>
// kernel: tpu_custom_call.1
$region0: #{tpu_custom_call.1}
  #allocation0 [shape = 'u32[]', space=smem, size = 0x4, offset = 0x4, fixed_abs, tag = 'smem constant byte address 0x4 - core index']
  #allocation1 [shape = 'u32[144,128]{1,0:T(1,128)}', space=vmem, size = 0x12000, scoped, tag = 'internal scratch']
  %s0 = inlined_call_operand.vmem [shape: bf16[256,24], index: 0, kind: input, shape index: {}]
  %s1 = inlined_call_operand.vmem [shape: bf16[2,32,32], index: 1, kind: input, shape index: {}]
  %s2 = inlined_call_operand.vmem [shape: f32[2,3,32], index: 2, kind: input, shape index: {}]
  %s3 = inlined_call_operand.vmem [shape: bf16[24,4], index: 3, kind: input, shape index: {}]
  %s4 = inlined_call_operand.vmem [shape: f32[1,4], index: 4, kind: input, shape index: {}]
  %s5 = inlined_call_operand.vmem [shape: bf16[32,16], index: 5, kind: input, shape index: {}]
  %s6 = inlined_call_operand.vmem [shape: f32[3,16], index: 6, kind: input, shape index: {}]
  %s7 = inlined_call_operand.vmem [shape: f32[256,16], index: 7, kind: output, shape index: {}]
  %s8 = sld [smem:[#allocation0]]
  $region61: #{tpu_custom_call.1} parent=0
    _
  %s10 = ssub.s32 1, %s8
  %s11 = scalar_select 0, %s10, %s8
  loop: start=0, step=1, limit=4
  $region2: #{tpu_custom_call.1} parent=0 // loop_pre_header
    _
  $region3: #{tpu_custom_call.1} parent=0 // loop_header
    %s13 = sphi 0, %s17
    %p14 = scmp.ge.s32.totalorder %s13, 4
    %s23 = sphi 0, %s25
    %s26 = sphi 0, %s23
    %s27 = sphi 0, %s26
    %s43 = sphi 0, %s27
    %s47 = sphi 0, %s47
    %s49 = sphi 0, %s47
    %s50 = sphi 0, %s49
    %s64 = sphi 0, %s50
    %s68 = sphi 0, %s68
    %s70 = sphi 0, %s68
    %s71 = sphi 0, %s70
    %s85 = sphi 0, %s71
    %s89 = sphi 0, %s89
    %s91 = sphi 0, %s89
    %s92 = sphi 0, %s91
    %s106 = sphi 0, %s92
    %s110 = sphi 0, %s110
    %s112 = sphi 0, %s110
    %s113 = sphi 0, %s112
    %s127 = sphi 0, %s113
    %s131 = sphi 0, %s131
    %s133 = sphi 0, %s131
    %s134 = sphi 0, %s133
    %s148 = sphi 0, %s134
    %s152 = sphi 0, %s152
    %s154 = sphi 0, %s152
    %s155 = sphi 0, %s154
    %s169 = sphi 0, %s155
    %s175 = sphi 0, %s177
    %s178 = sphi 0, %s175
    %s179 = sphi 0, %s178
    %s195 = sphi 0, %s179
  $region4: #{tpu_custom_call.1} parent=0 // loop_header_branch
    %16 = sbr.rel (%p14) target = $region8
  $region5: #{tpu_custom_call.1} parent=0 // loop_body
    %s18 = ssub.s32 %s13, 1
    %s19 = ssub.s32 %s13, 2
    %s20 = sadd.s32 %s13, 1
    %s21 = ssub.s32 %s13, %s20
    %p22 = scmp.eq.s32.totalorder %s21, 0
    %s24 = sadd.s32 %s23, 1
    %s25 = scalar_select %p22, %s23, %s24
    %p28 = pneg %p22
    %p29 = scmp.eq.s32.totalorder %s13, 1
    %p30 = por %p28, %p29
    %p31 = scmp.ne.s32.totalorder %s23, %s26
    %p32 = scmp.eq.s32.totalorder %s13, 0
    %p33 = por %p31, %p32
    %p34 = scmp.ne.s32.totalorder %s23, %s26
    %p35 = scmp.eq.s32.totalorder %s18, 1
    %p36 = por %p34, %p35
    %p37 = scmp.ne.s32.totalorder %s26, %s27
    %p38 = scmp.eq.s32.totalorder %s18, 0
    %p39 = por %p37, %p38
    %p40 = scmp.ne.s32.totalorder %s26, %s27
    %p41 = scmp.eq.s32.totalorder %s19, 1
    %p42 = por %p40, %p41
    %p44 = scmp.ne.s32.totalorder %s27, %s43
    %p45 = scmp.eq.s32.totalorder %s19, 0
    %p46 = por %p44, %p45
    %s48 = sadd.s32 %s47, 1
    %p51 = scmp.eq.s32.totalorder %s13, 1
    %p52 = scmp.ne.s32.totalorder %s47, %s49
    %p53 = scmp.eq.s32.totalorder %s13, 0
    %p54 = por %p52, %p53
    %p55 = scmp.ne.s32.totalorder %s47, %s49
    %p56 = scmp.eq.s32.totalorder %s18, 1
    %p57 = por %p55, %p56
    %p58 = scmp.ne.s32.totalorder %s49, %s50
    %p59 = scmp.eq.s32.totalorder %s18, 0
    %p60 = por %p58, %p59
    %p61 = scmp.ne.s32.totalorder %s49, %s50
    %p62 = scmp.eq.s32.totalorder %s19, 1
    %p63 = por %p61, %p62
    %p65 = scmp.ne.s32.totalorder %s50, %s64
    %p66 = scmp.eq.s32.totalorder %s19, 0
    %p67 = por %p65, %p66
    %s69 = sadd.s32 %s68, 1
    %p72 = scmp.eq.s32.totalorder %s13, 1
    %p73 = scmp.ne.s32.totalorder %s68, %s70
    %p74 = scmp.eq.s32.totalorder %s13, 0
    %p75 = por %p73, %p74
    %p76 = scmp.ne.s32.totalorder %s68, %s70
    %p77 = scmp.eq.s32.totalorder %s18, 1
    %p78 = por %p76, %p77
    %p79 = scmp.ne.s32.totalorder %s70, %s71
    %p80 = scmp.eq.s32.totalorder %s18, 0
    %p81 = por %p79, %p80
    %p82 = scmp.ne.s32.totalorder %s70, %s71
    %p83 = scmp.eq.s32.totalorder %s19, 1
    %p84 = por %p82, %p83
    %p86 = scmp.ne.s32.totalorder %s71, %s85
    %p87 = scmp.eq.s32.totalorder %s19, 0
    %p88 = por %p86, %p87
    %s90 = sadd.s32 %s89, 1
    %p93 = scmp.eq.s32.totalorder %s13, 1
    %p94 = scmp.ne.s32.totalorder %s89, %s91
    %p95 = scmp.eq.s32.totalorder %s13, 0
    %p96 = por %p94, %p95
    %p97 = scmp.ne.s32.totalorder %s89, %s91
    %p98 = scmp.eq.s32.totalorder %s18, 1
    %p99 = por %p97, %p98
    %p100 = scmp.ne.s32.totalorder %s91, %s92
    %p101 = scmp.eq.s32.totalorder %s18, 0
    %p102 = por %p100, %p101
    %p103 = scmp.ne.s32.totalorder %s91, %s92
    %p104 = scmp.eq.s32.totalorder %s19, 1
    %p105 = por %p103, %p104
    %p107 = scmp.ne.s32.totalorder %s92, %s106
    %p108 = scmp.eq.s32.totalorder %s19, 0
    %p109 = por %p107, %p108
    %s111 = sadd.s32 %s110, 1
    %p114 = scmp.eq.s32.totalorder %s13, 1
    %p115 = scmp.ne.s32.totalorder %s110, %s112
    %p116 = scmp.eq.s32.totalorder %s13, 0
    %p117 = por %p115, %p116
    %p118 = scmp.ne.s32.totalorder %s110, %s112
    %p119 = scmp.eq.s32.totalorder %s18, 1
    %p120 = por %p118, %p119
    %p121 = scmp.ne.s32.totalorder %s112, %s113
    %p122 = scmp.eq.s32.totalorder %s18, 0
    %p123 = por %p121, %p122
    %p124 = scmp.ne.s32.totalorder %s112, %s113
    %p125 = scmp.eq.s32.totalorder %s19, 1
    %p126 = por %p124, %p125
    %p128 = scmp.ne.s32.totalorder %s113, %s127
    %p129 = scmp.eq.s32.totalorder %s19, 0
    %p130 = por %p128, %p129
    %s132 = sadd.s32 %s131, 1
    %p135 = scmp.eq.s32.totalorder %s13, 1
    %p136 = scmp.ne.s32.totalorder %s131, %s133
    %p137 = scmp.eq.s32.totalorder %s13, 0
    %p138 = por %p136, %p137
    %p139 = scmp.ne.s32.totalorder %s131, %s133
    %p140 = scmp.eq.s32.totalorder %s18, 1
    %p141 = por %p139, %p140
    %p142 = scmp.ne.s32.totalorder %s133, %s134
    %p143 = scmp.eq.s32.totalorder %s18, 0
    %p144 = por %p142, %p143
    %p145 = scmp.ne.s32.totalorder %s133, %s134
    %p146 = scmp.eq.s32.totalorder %s19, 1
    %p147 = por %p145, %p146
    %p149 = scmp.ne.s32.totalorder %s134, %s148
    %p150 = scmp.eq.s32.totalorder %s19, 0
    %p151 = por %p149, %p150
    %s153 = sadd.s32 %s152, 1
    %p156 = scmp.eq.s32.totalorder %s13, 1
    %p157 = scmp.ne.s32.totalorder %s152, %s154
    %p158 = scmp.eq.s32.totalorder %s13, 0
    %p159 = por %p157, %p158
    %p160 = scmp.ne.s32.totalorder %s152, %s154
    %p161 = scmp.eq.s32.totalorder %s18, 1
    %p162 = por %p160, %p161
    %p163 = scmp.ne.s32.totalorder %s154, %s155
    %p164 = scmp.eq.s32.totalorder %s18, 0
    %p165 = por %p163, %p164
    %p166 = scmp.ne.s32.totalorder %s154, %s155
    %p167 = scmp.eq.s32.totalorder %s19, 1
    %p168 = por %p166, %p167
    %p170 = scmp.ne.s32.totalorder %s155, %s169
    %p171 = scmp.eq.s32.totalorder %s19, 0
    %p172 = por %p170, %p171
    %s173 = ssub.s32 %s13, %s20
    %p174 = scmp.eq.s32.totalorder %s173, 0
    %s176 = sadd.s32 %s175, 1
    %s177 = scalar_select %p174, %s175, %s176
    %p180 = pneg %p174
    %p181 = scmp.eq.s32.totalorder %s13, 1
    %p182 = por %p180, %p181
    %p183 = scmp.ne.s32.totalorder %s175, %s178
    %p184 = scmp.eq.s32.totalorder %s13, 0
    %p185 = por %p183, %p184
    %p186 = scmp.ne.s32.totalorder %s175, %s178
    %p187 = scmp.eq.s32.totalorder %s18, 1
    %p188 = por %p186, %p187
    %p189 = scmp.ne.s32.totalorder %s178, %s179
    %p190 = scmp.eq.s32.totalorder %s18, 0
    %p191 = por %p189, %p190
    %p192 = scmp.ne.s32.totalorder %s178, %s179
    %p193 = scmp.eq.s32.totalorder %s19, 1
    %p194 = por %p192, %p193
    %p196 = scmp.ne.s32.totalorder %s179, %s195
    %p197 = scmp.eq.s32.totalorder %s19, 0
    %p198 = por %p196, %p197
    %p199 = scmp.le.s32.totalorder 1, %s13
    %p200 = scmp.lt.s32.totalorder %s13, 3
    %p201 = pnand %p199, %p200
    %p202 = pneg %p201
    // Predicated region
    $region9: #{tpu_custom_call.1} parent=5 // pred_check
      _
    $region10: #{tpu_custom_call.1} parent=5 // pred_check_branch
      %204 = sbr.rel (%p201) target = $region12
    $region11: #{tpu_custom_call.1} parent=5 // pred_region
      %s205 = ssub.s32 %s13, 1
      // Predicated region
      $region13: #{tpu_custom_call.1} parent=11 // pred_check
        %p206 = pneg %p60
      $region14: #{tpu_custom_call.1} parent=11 // pred_check_branch
        %208 = sbr.rel (%p206) target = $region16
      $region15: #{tpu_custom_call.1} parent=11 // pred_region
        _
      $region16: #{tpu_custom_call.1} parent=11 // pred_fallthru
        _
      // Predicated region
      $region17: #{tpu_custom_call.1} parent=11 // pred_check
        %p209 = pneg %p81
      $region18: #{tpu_custom_call.1} parent=11 // pred_check_branch
        %211 = sbr.rel (%p209) target = $region20
      $region19: #{tpu_custom_call.1} parent=11 // pred_region
        _
      $region20: #{tpu_custom_call.1} parent=11 // pred_fallthru
        _
      // Predicated region
      $region21: #{tpu_custom_call.1} parent=11 // pred_check
        %p212 = pneg %p102
      $region22: #{tpu_custom_call.1} parent=11 // pred_check_branch
        %214 = sbr.rel (%p212) target = $region24
      $region23: #{tpu_custom_call.1} parent=11 // pred_region
        _
      $region24: #{tpu_custom_call.1} parent=11 // pred_fallthru
        _
      // Predicated region
      $region25: #{tpu_custom_call.1} parent=11 // pred_check
        %p215 = pneg %p123
      $region26: #{tpu_custom_call.1} parent=11 // pred_check_branch
        %217 = sbr.rel (%p215) target = $region28
      $region27: #{tpu_custom_call.1} parent=11 // pred_region
        _
      $region28: #{tpu_custom_call.1} parent=11 // pred_fallthru
        _
      // Predicated region
      $region29: #{tpu_custom_call.1} parent=11 // pred_check
        %p218 = pneg %p144
      $region30: #{tpu_custom_call.1} parent=11 // pred_check_branch
        %220 = sbr.rel (%p218) target = $region32
      $region31: #{tpu_custom_call.1} parent=11 // pred_region
        _
      $region32: #{tpu_custom_call.1} parent=11 // pred_fallthru
        _
      // Predicated region
      $region33: #{tpu_custom_call.1} parent=11 // pred_check
        %p221 = pneg %p165
      $region34: #{tpu_custom_call.1} parent=11 // pred_check_branch
        %223 = sbr.rel (%p221) target = $region36
      $region35: #{tpu_custom_call.1} parent=11 // pred_region
        _
      $region36: #{tpu_custom_call.1} parent=11 // pred_fallthru
        _
    $region12: #{tpu_custom_call.1} parent=5 // pred_fallthru
      _
    %p224 = scmp.lt.s32.totalorder %s13, 2
    // Predicated region
    $region37: #{tpu_custom_call.1} parent=5 // pred_check
      %p225 = pneg %p224
    $region38: #{tpu_custom_call.1} parent=5 // pred_check_branch
      %227 = sbr.rel (%p225) target = $region40
    $region39: #{tpu_custom_call.1} parent=5 // pred_region
      // Predicated region
      $region41: #{tpu_custom_call.1} parent=39 // pred_check
        %p228 = pneg %p33
      $region42: #{tpu_custom_call.1} parent=39 // pred_check_branch
        %230 = sbr.rel (%p228) target = $region44
      $region43: #{tpu_custom_call.1} parent=39 // pred_region
        %s231 = smul.u32 16, %s13
        %p232 = scmp.lt.s32.totalorder %s231, 31
        %s233 = scalar_select %p232, %s231, 31
        %s234 = smul.addr %s233, 4
        %s235 = scalar_lea.vmem %s0, %s234
        %s236 = smul.u32 16, %s13
      $region44: #{tpu_custom_call.1} parent=39 // pred_fallthru
        _
    $region40: #{tpu_custom_call.1} parent=5 // pred_fallthru
      _
    %p237 = scmp.le.s32.totalorder 1, %s13
    %p238 = scmp.lt.s32.totalorder %s13, 3
    %p239 = pnand %p237, %p238
    %p240 = pneg %p239
    // Predicated region
    $region45: #{tpu_custom_call.1} parent=5 // pred_check
      _
    $region46: #{tpu_custom_call.1} parent=5 // pred_check_branch
      %242 = sbr.rel (%p239) target = $region48
    $region47: #{tpu_custom_call.1} parent=5 // pred_region
      %s243 = ssub.s32 %s13, 1
      %s244 = smul.u32 16, %s18
      %p245 = scmp.lt.s32.totalorder %s244, 31
      %s246 = scalar_select %p245, %s244, 31
      %s247 = smul.addr %s246, 4
      %s248 = scalar_lea.vmem %s0, %s247
      %p249 = pneg %p39
      %p250 = pneg %p36
      %p251 = pneg %p60
      %p252 = pneg %p57
      %p253 = pneg %p81
      %p254 = pneg %p78
      %p255 = pneg %p102
      %p256 = pneg %p99
      %p257 = pneg %p123
      %p258 = pneg %p120
      %p259 = pneg %p144
      %p260 = pneg %p141
      %p261 = pneg %p165
      %p262 = pneg %p162
      %p263 = pneg %p191
      %p264 = pneg %p188
      %s265 = smul.u32 16, %s18
      %p266 = scmp.lt.s32.totalorder %s265, 31
      %s267 = scalar_select %p266, %s265, 31
      %s268 = smul.addr %s267, 8
      %s269 = scalar_lea.vmem %s7, %s268
      %s270 = smul.u32 16, %s18
      %p271 = scmp.lt.s32.totalorder %s270, 31
      %s272 = scalar_select %p271, %s270, 31
      %s273 = smul.addr %s272, 4
      %s274 = scalar_lea.vmem %s0, %s273
      %s275 = smul.u32 16, %s18
      %s276 = smul.u32 16, %s18
      %p277 = scmp.lt.s32.totalorder %s276, 31
      %s278 = scalar_select %p277, %s276, 31
      %s279 = smul.addr %s278, 8
      %s280 = scalar_lea.vmem %s7, %s279
      %s281 = smul.u32 16, %s18
      %v283 = vld [vmem:[%s274] sm:$0xf]
      %v284 = vld [vmem:[%s274 + $0x4] sm:$0xf]
      %v285 = vld [vmem:[%s274 + $0x8] sm:$0xf]
      %v286 = vld [vmem:[%s274 + $0xc] sm:$0xf]
      %v287 = vld [vmem:[%s274 + $0x10] sm:$0xf]
      %v288 = vld [vmem:[%s274 + $0x14] sm:$0xf]
      %v289 = vld [vmem:[%s274 + $0x18] sm:$0xf]
      %v290 = vld [vmem:[%s274 + $0x1c] sm:$0xf]
      %v291 = vld [vmem:[%s274 + $0x20] sm:$0xf]
      %v292 = vld [vmem:[%s274 + $0x24] sm:$0xf]
      %v293 = vld [vmem:[%s274 + $0x28] sm:$0xf]
      %v294 = vld [vmem:[%s274 + $0x2c] sm:$0xf]
      %v295 = vld [vmem:[%s274 + $0x30] sm:$0xf]
      %v296 = vld [vmem:[%s274 + $0x34] sm:$0xf]
      %v297 = vld [vmem:[%s274 + $0x38] sm:$0xf]
      %v298 = vld [vmem:[%s274 + $0x3c] sm:$0xf]
      %v299 = vld [vmem:[%s1] sm:$0xf]
      %v300 = vld [vmem:[%s1 + $0x4] sm:$0xf]
      %v301 = vld [vmem:[%s1 + $0x8] sm:$0xf]
      %v302 = vld [vmem:[%s2] sm:$0x7]
      %v303 = vlaneseq
      %v304 = vshrl.u32 %v303, 7
      %v305 = vsub.s32 0, %v304
      %v306 = vrot.slane %v302, %v305
      %v323 = vunpack.c.l.b16 %v283
      %v324 = vunpack.c.l.b16 %v284
      %v325 = vunpack.c.l.b16 %v285
      %v326 = vunpack.c.l.b16 %v286
      %v327 = vunpack.c.l.b16 %v287
      %v328 = vunpack.c.l.b16 %v288
      %v329 = vunpack.c.l.b16 %v289
      %v330 = vunpack.c.l.b16 %v290
      %v331 = vunpack.c.l.b16 %v291
      %v332 = vunpack.c.l.b16 %v292
      %v333 = vunpack.c.l.b16 %v293
      %v334 = vunpack.c.l.b16 %v294
      %v335 = vunpack.c.l.b16 %v295
      %v336 = vunpack.c.l.b16 %v296
      %v337 = vunpack.c.l.b16 %v297
      %v338 = vunpack.c.l.b16 %v298
      %v339 = vpack.c.b16 %v324, %v323
      %v340 = vpack.c.b16 %v326, %v325
      %v341 = vpack.c.b16 %v328, %v327
      %v342 = vpack.c.b16 %v330, %v329
      %v343 = vpack.c.b16 %v332, %v331
      %v344 = vpack.c.b16 %v334, %v333
      %v345 = vpack.c.b16 %v336, %v335
      %v346 = vpack.c.b16 %v338, %v337
      %v350 = vunpack.c.l.b16 %v299
      %v351 = vunpack.c.l.b16 %v300
      %v352 = vunpack.c.l.b16 %v301
      %v353 = vpack.c.b16 %v351, %v350
      %v354 = vpack.c.b16 %v352, %v352
      %vm356 = vcmask 195584
      %v358 = vsel %vm356, %v339, 0
      %v361 = vsel %vm356, %v340, 0
      %v364 = vsel %vm356, %v341, 0
      %v367 = vsel %vm356, %v342, 0
      %v370 = vsel %vm356, %v343, 0
      %v373 = vsel %vm356, %v344, 0
      %v376 = vsel %vm356, %v345, 0
      %v379 = vsel %vm356, %v346, 0
      %vm381 = vcmask 1043456
      %v383 = vsel %vm381, %v354, 0
      %385 = vmatprep.subr.bf16.mxu0 0
      %386 = vmatpush1.bf16.msra.mxu0 %v353
      %387 = vmatprep.subr.bf16.mxu0 0
      %388 = vmatpush1.bf16.msra.mxu0 %v383
      %389 = vmatprep.subr.bf16.mxu0 0
      %390 = vmatpush1.bf16.msra.mxu0 0
      %391 = vmatprep.subr.bf16.mxu0 0
      %392 = vmatpush1.bf16.msra.mxu0 0
      %393 = vmatprep.subr.bf16.mxu0 0
      %394 = vmatpush1.bf16.msra.mxu0 0
      %395 = vmatprep.subr.bf16.mxu0 0
      %396 = vmatpush1.bf16.msra.mxu0 0
      %397 = vmatprep.subr.bf16.mxu0 0
      %398 = vmatpush1.bf16.msra.mxu0 0
      %399 = vmatprep.subr.bf16.mxu0 0
      %400 = vmatpush1.bf16.msra.mxu0 0
      %401 = vmatprep.subr.bf16.mxu0 0
      %402 = vmatpush1.bf16.msra.mxu0 0
      %403 = vmatprep.subr.bf16.mxu0 0
      %404 = vmatpush1.bf16.msra.mxu0 0
      %405 = vmatprep.subr.bf16.mxu0 0
      %406 = vmatpush1.bf16.msra.mxu0 0
      %407 = vmatprep.subr.bf16.mxu0 0
      %408 = vmatpush1.bf16.msra.mxu0 0
      %409 = vmatprep.subr.bf16.mxu0 0
      %410 = vmatpush1.bf16.msra.mxu0 0
      %411 = vmatprep.subr.bf16.mxu0 0
      %412 = vmatpush1.bf16.msra.mxu0 0
      %413 = vmatprep.subr.bf16.mxu0 0
      %414 = vmatpush1.bf16.msra.mxu0 0
      %415 = vmatprep.subr.bf16.mxu0 0
      %416 = vmatpush1.bf16.msra.mxu0 0
      %417 = vmatprep.mubr.bf16.mxu0 0
      %418 = vmatmul.mubr.bf16.gmra.mrb[0].mxu0 %v358
      %v419 = vpop.f32.mrb[0].mxu0
      %v420 = vadd.f32 %v306, %v419
      %v421 = vpop.f32.mrb[0].mxu0
      %v422 = vpop.f32.mrb[0].mxu0
      %v423 = vadd.f32 %v306, %v422
      %v424 = vpop.f32.mrb[0].mxu0
      %425 = vmatprep.mubr.bf16.mxu0 0
      %426 = vmatmul.mubr.bf16.gmra.mrb[0].mxu0 %v361
      %v427 = vpop.f32.mrb[0].mxu0
      %v428 = vadd.f32 %v306, %v427
      %v429 = vpop.f32.mrb[0].mxu0
      %v430 = vpop.f32.mrb[0].mxu0
      %v431 = vadd.f32 %v306, %v430
      %v432 = vpop.f32.mrb[0].mxu0
      %433 = vmatprep.mubr.bf16.mxu0 0
      %434 = vmatmul.mubr.bf16.gmra.mrb[0].mxu0 %v364
      %v435 = vpop.f32.mrb[0].mxu0
      %v436 = vadd.f32 %v306, %v435
      %v437 = vpop.f32.mrb[0].mxu0
      %v438 = vpop.f32.mrb[0].mxu0
      %v439 = vadd.f32 %v306, %v438
      %v440 = vpop.f32.mrb[0].mxu0
      %441 = vmatprep.mubr.bf16.mxu0 0
      %442 = vmatmul.mubr.bf16.gmra.mrb[0].mxu0 %v367
      %v443 = vpop.f32.mrb[0].mxu0
      %v444 = vadd.f32 %v306, %v443
      %v445 = vpop.f32.mrb[0].mxu0
      %v446 = vpop.f32.mrb[0].mxu0
      %v447 = vadd.f32 %v306, %v446
      %v448 = vpop.f32.mrb[0].mxu0
      %449 = vmatprep.mubr.bf16.mxu0 0
      %450 = vmatmul.mubr.bf16.gmra.mrb[0].mxu0 %v370
      %v451 = vpop.f32.mrb[0].mxu0
      %v452 = vadd.f32 %v306, %v451
      %v453 = vpop.f32.mrb[0].mxu0
      %v454 = vpop.f32.mrb[0].mxu0
      %v455 = vadd.f32 %v306, %v454
      %v456 = vpop.f32.mrb[0].mxu0
      %457 = vmatprep.mubr.bf16.mxu0 0
      %458 = vmatmul.mubr.bf16.gmra.mrb[0].mxu0 %v373
      %v459 = vpop.f32.mrb[0].mxu0
      %v460 = vadd.f32 %v306, %v459
      %v461 = vpop.f32.mrb[0].mxu0
      %v462 = vpop.f32.mrb[0].mxu0
      %v463 = vadd.f32 %v306, %v462
      %v464 = vpop.f32.mrb[0].mxu0
      %465 = vmatprep.mubr.bf16.mxu0 0
      %466 = vmatmul.mubr.bf16.gmra.mrb[0].mxu0 %v376
      %v467 = vpop.f32.mrb[0].mxu0
      %v468 = vadd.f32 %v306, %v467
      %v469 = vpop.f32.mrb[0].mxu0
      %v470 = vpop.f32.mrb[0].mxu0
      %v471 = vadd.f32 %v306, %v470
      %v472 = vpop.f32.mrb[0].mxu0
      %473 = vmatprep.mubr.bf16.mxu0 0
      %474 = vmatmul.mubr.bf16.gmra.mrb[0].mxu0 %v379
      %v475 = vpop.f32.mrb[0].mxu0
      %v476 = vadd.f32 %v306, %v475
      %v477 = vpop.f32.mrb[0].mxu0
      %v478 = vpop.f32.mrb[0].mxu0
      %v479 = vadd.f32 %v306, %v478
      %v480 = vpop.f32.mrb[0].mxu0
      %481 = vdwg.mxu0
      %vm482 = vcmask 261120
      %v483 = vsel %vm482, %v420, 0.0
      %484 = vadd.xlane.f32.xlu0 %v483
      %v485 = vpop.xlane.xlu0 %484
      %v486 = vsel %vm482, %v423, 0.0
      %487 = vadd.xlane.f32.xlu0 %v486
      %v488 = vpop.xlane.xlu0 %487
      %v489 = vsel %vm482, %v428, 0.0
      %490 = vadd.xlane.f32.xlu0 %v489
      %v491 = vpop.xlane.xlu0 %490
      %v492 = vsel %vm482, %v431, 0.0
      %493 = vadd.xlane.f32.xlu0 %v492
      %v494 = vpop.xlane.xlu0 %493
      %v495 = vsel %vm482, %v436, 0.0
      %496 = vadd.xlane.f32.xlu0 %v495
      %v497 = vpop.xlane.xlu0 %496
      %v498 = vsel %vm482, %v439, 0.0
      %499 = vadd.xlane.f32.xlu0 %v498
      %v500 = vpop.xlane.xlu0 %499
      %v501 = vsel %vm482, %v444, 0.0
      %502 = vadd.xlane.f32.xlu0 %v501
      %v503 = vpop.xlane.xlu0 %502
      %v504 = vsel %vm482, %v447, 0.0
      %505 = vadd.xlane.f32.xlu0 %v504
      %v506 = vpop.xlane.xlu0 %505
      %v507 = vsel %vm482, %v452, 0.0
      %508 = vadd.xlane.f32.xlu0 %v507
      %v509 = vpop.xlane.xlu0 %508
      %v510 = vsel %vm482, %v455, 0.0
      %511 = vadd.xlane.f32.xlu0 %v510
      %v512 = vpop.xlane.xlu0 %511
      %v513 = vsel %vm482, %v460, 0.0
      %514 = vadd.xlane.f32.xlu0 %v513
      %v515 = vpop.xlane.xlu0 %514
      %v516 = vsel %vm482, %v463, 0.0
      %517 = vadd.xlane.f32.xlu0 %v516
      %v518 = vpop.xlane.xlu0 %517
      %v519 = vsel %vm482, %v468, 0.0
      %520 = vadd.xlane.f32.xlu0 %v519
      %v521 = vpop.xlane.xlu0 %520
      %v522 = vsel %vm482, %v471, 0.0
      %523 = vadd.xlane.f32.xlu0 %v522
      %v524 = vpop.xlane.xlu0 %523
      %v525 = vsel %vm482, %v476, 0.0
      %526 = vadd.xlane.f32.xlu0 %v525
      %v527 = vpop.xlane.xlu0 %526
      %v528 = vsel %vm482, %v479, 0.0
      %529 = vadd.xlane.f32.xlu0 %v528
      %v530 = vpop.xlane.xlu0 %529
      %v531 = vrcp.pop 32.0
      %v532 = vmul.f32 %v485, %v531
      %v533 = vmul.f32 %v488, %v531
      %v534 = vmul.f32 %v491, %v531
      %v535 = vmul.f32 %v494, %v531
      %v536 = vmul.f32 %v497, %v531
      %v537 = vmul.f32 %v500, %v531
      %v538 = vmul.f32 %v503, %v531
      %v539 = vmul.f32 %v506, %v531
      %v540 = vmul.f32 %v509, %v531
      %v541 = vmul.f32 %v512, %v531
      %v542 = vmul.f32 %v515, %v531
      %v543 = vmul.f32 %v518, %v531
      %v544 = vmul.f32 %v521, %v531
      %v545 = vmul.f32 %v524, %v531
      %v546 = vmul.f32 %v527, %v531
      %v547 = vmul.f32 %v530, %v531
      %v548 = vmul.f32 %v420, %v420
      %v549 = vmul.f32 %v423, %v423
      %v550 = vmul.f32 %v428, %v428
      %v551 = vmul.f32 %v431, %v431
      %v552 = vmul.f32 %v436, %v436
      %v553 = vmul.f32 %v439, %v439
      %v554 = vmul.f32 %v444, %v444
      %v555 = vmul.f32 %v447, %v447
      %v556 = vmul.f32 %v452, %v452
      %v557 = vmul.f32 %v455, %v455
      %v558 = vmul.f32 %v460, %v460
      %v559 = vmul.f32 %v463, %v463
      %v560 = vmul.f32 %v468, %v468
      %v561 = vmul.f32 %v471, %v471
      %v562 = vmul.f32 %v476, %v476
      %v563 = vmul.f32 %v479, %v479
      %v564 = vsel %vm482, %v548, 0.0
      %565 = vadd.xlane.f32.xlu0 %v564
      %v566 = vpop.xlane.xlu0 %565
      %v567 = vsel %vm482, %v549, 0.0
      %568 = vadd.xlane.f32.xlu0 %v567
      %v569 = vpop.xlane.xlu0 %568
      %v570 = vsel %vm482, %v550, 0.0
      %571 = vadd.xlane.f32.xlu0 %v570
      %v572 = vpop.xlane.xlu0 %571
      %v573 = vsel %vm482, %v551, 0.0
      %574 = vadd.xlane.f32.xlu0 %v573
      %v575 = vpop.xlane.xlu0 %574
      %v576 = vsel %vm482, %v552, 0.0
      %577 = vadd.xlane.f32.xlu0 %v576
      %v578 = vpop.xlane.xlu0 %577
      %v579 = vsel %vm482, %v553, 0.0
      %580 = vadd.xlane.f32.xlu0 %v579
      %v581 = vpop.xlane.xlu0 %580
      %v582 = vsel %vm482, %v554, 0.0
      %583 = vadd.xlane.f32.xlu0 %v582
      %v584 = vpop.xlane.xlu0 %583
      %v585 = vsel %vm482, %v555, 0.0
      %586 = vadd.xlane.f32.xlu0 %v585
      %v587 = vpop.xlane.xlu0 %586
      %v588 = vsel %vm482, %v556, 0.0
      %589 = vadd.xlane.f32.xlu0 %v588
      %v590 = vpop.xlane.xlu0 %589
      %v591 = vsel %vm482, %v557, 0.0
      %592 = vadd.xlane.f32.xlu0 %v591
      %v593 = vpop.xlane.xlu0 %592
      %v594 = vsel %vm482, %v558, 0.0
      %595 = vadd.xlane.f32.xlu0 %v594
      %v596 = vpop.xlane.xlu0 %595
      %v597 = vsel %vm482, %v559, 0.0
      %598 = vadd.xlane.f32.xlu0 %v597
      %v599 = vpop.xlane.xlu0 %598
      %v600 = vsel %vm482, %v560, 0.0
      %601 = vadd.xlane.f32.xlu0 %v600
      %v602 = vpop.xlane.xlu0 %601
      %v603 = vsel %vm482, %v561, 0.0
      %604 = vadd.xlane.f32.xlu0 %v603
      %v605 = vpop.xlane.xlu0 %604
      %v606 = vsel %vm482, %v562, 0.0
      %607 = vadd.xlane.f32.xlu0 %v606
      %v608 = vpop.xlane.xlu0 %607
      %v609 = vsel %vm482, %v563, 0.0
      %610 = vadd.xlane.f32.xlu0 %v609
      %v611 = vpop.xlane.xlu0 %610
      %v612 = vmul.f32 %v566, %v531
      %v613 = vmul.f32 %v569, %v531
      %v614 = vmul.f32 %v572, %v531
      %v615 = vmul.f32 %v575, %v531
      %v616 = vmul.f32 %v578, %v531
      %v617 = vmul.f32 %v581, %v531
      %v618 = vmul.f32 %v584, %v531
      %v619 = vmul.f32 %v587, %v531
      %v620 = vmul.f32 %v590, %v531
      %v621 = vmul.f32 %v593, %v531
      %v622 = vmul.f32 %v596, %v531
      %v623 = vmul.f32 %v599, %v531
      %v624 = vmul.f32 %v602, %v531
      %v625 = vmul.f32 %v605, %v531
      %v626 = vmul.f32 %v608, %v531
      %v627 = vmul.f32 %v611, %v531
      %v628 = vmul.f32 %v532, %v532
      %v629 = vmul.f32 %v533, %v533
      %v630 = vmul.f32 %v534, %v534
      %v631 = vmul.f32 %v535, %v535
      %v632 = vmul.f32 %v536, %v536
      %v633 = vmul.f32 %v537, %v537
      %v634 = vmul.f32 %v538, %v538
      %v635 = vmul.f32 %v539, %v539
      %v636 = vmul.f32 %v540, %v540
      %v637 = vmul.f32 %v541, %v541
      %v638 = vmul.f32 %v542, %v542
      %v639 = vmul.f32 %v543, %v543
      %v640 = vmul.f32 %v544, %v544
      %v641 = vmul.f32 %v545, %v545
      %v642 = vmul.f32 %v546, %v546
      %v643 = vmul.f32 %v547, %v547
      %v644 = vsub.f32 %v612, %v628
      %v645 = vsub.f32 %v613, %v629
      %v646 = vsub.f32 %v614, %v630
      %v647 = vsub.f32 %v615, %v631
      %v648 = vsub.f32 %v616, %v632
      %v649 = vsub.f32 %v617, %v633
      %v650 = vsub.f32 %v618, %v634
      %v651 = vsub.f32 %v619, %v635
      %v652 = vsub.f32 %v620, %v636
      %v653 = vsub.f32 %v621, %v637
      %v654 = vsub.f32 %v622, %v638
      %v655 = vsub.f32 %v623, %v639
      %v656 = vsub.f32 %v624, %v640
      %v657 = vsub.f32 %v625, %v641
      %v658 = vsub.f32 %v626, %v642
      %v659 = vsub.f32 %v627, %v643
      %v660 = vmax.f32 %v644, 0.0
      %v661 = vmax.f32 %v645, 0.0
      %v662 = vmax.f32 %v646, 0.0
      %v663 = vmax.f32 %v647, 0.0
      %v664 = vmax.f32 %v648, 0.0
      %v665 = vmax.f32 %v649, 0.0
      %v666 = vmax.f32 %v650, 0.0
      %v667 = vmax.f32 %v651, 0.0
      %v668 = vmax.f32 %v652, 0.0
      %v669 = vmax.f32 %v653, 0.0
      %v670 = vmax.f32 %v654, 0.0
      %v671 = vmax.f32 %v655, 0.0
      %v672 = vmax.f32 %v656, 0.0
      %v673 = vmax.f32 %v657, 0.0
      %v674 = vmax.f32 %v658, 0.0
      %v675 = vmax.f32 %v659, 0.0
      %v676 = vsub.f32 %v420, %v532
      %v677 = vsub.f32 %v423, %v533
      %v678 = vsub.f32 %v428, %v534
      %v679 = vsub.f32 %v431, %v535
      %v680 = vsub.f32 %v436, %v536
      %v681 = vsub.f32 %v439, %v537
      %v682 = vsub.f32 %v444, %v538
      %v683 = vsub.f32 %v447, %v539
      %v684 = vsub.f32 %v452, %v540
      %v685 = vsub.f32 %v455, %v541
      %v686 = vsub.f32 %v460, %v542
      %v687 = vsub.f32 %v463, %v543
      %v688 = vsub.f32 %v468, %v544
      %v689 = vsub.f32 %v471, %v545
      %v690 = vsub.f32 %v476, %v546
      %v691 = vsub.f32 %v479, %v547
      %v692 = vadd.f32 %v660, 1e-05
      %v693 = vadd.f32 %v661, 1e-05
      %v694 = vadd.f32 %v662, 1e-05
      %v695 = vadd.f32 %v663, 1e-05
      %v696 = vadd.f32 %v664, 1e-05
      %v697 = vadd.f32 %v665, 1e-05
      %v698 = vadd.f32 %v666, 1e-05
      %v699 = vadd.f32 %v667, 1e-05
      %v700 = vadd.f32 %v668, 1e-05
      %v701 = vadd.f32 %v669, 1e-05
      %v702 = vadd.f32 %v670, 1e-05
      %v703 = vadd.f32 %v671, 1e-05
      %v704 = vadd.f32 %v672, 1e-05
      %v705 = vadd.f32 %v673, 1e-05
      %v706 = vadd.f32 %v674, 1e-05
      %v707 = vadd.f32 %v675, 1e-05
      %v708 = vrsqrt.pop %v692
      %v709 = vrsqrt.pop %v693
      %v710 = vrsqrt.pop %v694
      %v711 = vrsqrt.pop %v695
      %v712 = vrsqrt.pop %v696
      %v713 = vrsqrt.pop %v697
      %v714 = vrsqrt.pop %v698
      %v715 = vrsqrt.pop %v699
      %v716 = vrsqrt.pop %v700
      %v717 = vrsqrt.pop %v701
      %v718 = vrsqrt.pop %v702
      %v719 = vrsqrt.pop %v703
      %v720 = vrsqrt.pop %v704
      %v721 = vrsqrt.pop %v705
      %v722 = vrsqrt.pop %v706
      %v723 = vrsqrt.pop %v707
      %v724 = vmul.f32 %v676, %v708
      %v725 = vmul.f32 %v677, %v709
      %v726 = vmul.f32 %v678, %v710
      %v727 = vmul.f32 %v679, %v711
      %v728 = vmul.f32 %v680, %v712
      %v729 = vmul.f32 %v681, %v713
      %v730 = vmul.f32 %v682, %v714
      %v731 = vmul.f32 %v683, %v715
      %v732 = vmul.f32 %v684, %v716
      %v733 = vmul.f32 %v685, %v717
      %v734 = vmul.f32 %v686, %v718
      %v735 = vmul.f32 %v687, %v719
      %v736 = vmul.f32 %v688, %v720
      %v737 = vmul.f32 %v689, %v721
      %v738 = vmul.f32 %v690, %v722
      %v739 = vmul.f32 %v691, %v723
      %v740 = vlaneseq
      %v741 = vshrl.u32 %v740, 7
      %v742 = vsub.s32 1, %v741
      %v743 = vrot.slane %v302, %v742
      %v744 = vmul.f32 %v724, %v743
      %v745 = vmul.f32 %v725, %v743
      %v746 = vmul.f32 %v726, %v743
      %v747 = vmul.f32 %v727, %v743
      %v748 = vmul.f32 %v728, %v743
      %v749 = vmul.f32 %v729, %v743
      %v750 = vmul.f32 %v730, %v743
      %v751 = vmul.f32 %v731, %v743
      %v752 = vmul.f32 %v732, %v743
      %v753 = vmul.f32 %v733, %v743
      %v754 = vmul.f32 %v734, %v743
      %v755 = vmul.f32 %v735, %v743
      %v756 = vmul.f32 %v736, %v743
      %v757 = vmul.f32 %v737, %v743
      %v758 = vmul.f32 %v738, %v743
      %v759 = vmul.f32 %v739, %v743
      %v760 = vlaneseq
      %v761 = vshrl.u32 %v760, 7
      %v762 = vsub.s32 2, %v761
      %v763 = vrot.slane %v302, %v762
      %v764 = vadd.f32 %v744, %v763
      %v765 = vadd.f32 %v745, %v763
      %v766 = vadd.f32 %v746, %v763
      %v767 = vadd.f32 %v747, %v763
      %v768 = vadd.f32 %v748, %v763
      %v769 = vadd.f32 %v749, %v763
      %v770 = vadd.f32 %v750, %v763
      %v771 = vadd.f32 %v751, %v763
      %v772 = vadd.f32 %v752, %v763
      %v773 = vadd.f32 %v753, %v763
      %v774 = vadd.f32 %v754, %v763
      %v775 = vadd.f32 %v755, %v763
      %v776 = vadd.f32 %v756, %v763
      %v777 = vadd.f32 %v757, %v763
      %v778 = vadd.f32 %v758, %v763
      %v779 = vadd.f32 %v759, %v763
      %v780 = vmin.f32 %v764, 20.0
      %v781 = vmin.f32 %v765, 20.0
      %v782 = vmin.f32 %v766, 20.0
      %v783 = vmin.f32 %v767, 20.0
      %v784 = vmin.f32 %v768, 20.0
      %v785 = vmin.f32 %v769, 20.0
      %v786 = vmin.f32 %v770, 20.0
      %v787 = vmin.f32 %v771, 20.0
      %v788 = vmin.f32 %v772, 20.0
      %v789 = vmin.f32 %v773, 20.0
      %v790 = vmin.f32 %v774, 20.0
      %v791 = vmin.f32 %v775, 20.0
      %v792 = vmin.f32 %v776, 20.0
      %v793 = vmin.f32 %v777, 20.0
      %v794 = vmin.f32 %v778, 20.0
      %v795 = vmin.f32 %v779, 20.0
      %v796 = vmul.f32 %v780, 1.442695
      %v797 = vpow.pop %v796
      %v798 = vmul.f32 %v781, 1.442695
      %v799 = vpow.pop %v798
      %v800 = vmul.f32 %v782, 1.442695
      %v801 = vpow.pop %v800
      %v802 = vmul.f32 %v783, 1.442695
      %v803 = vpow.pop %v802
      %v804 = vmul.f32 %v784, 1.442695
      %v805 = vpow.pop %v804
      %v806 = vmul.f32 %v785, 1.442695
      %v807 = vpow.pop %v806
      %v808 = vmul.f32 %v786, 1.442695
      %v809 = vpow.pop %v808
      %v810 = vmul.f32 %v787, 1.442695
      %v811 = vpow.pop %v810
      %v812 = vmul.f32 %v788, 1.442695
      %v813 = vpow.pop %v812
      %v814 = vmul.f32 %v789, 1.442695
      %v815 = vpow.pop %v814
      %v816 = vmul.f32 %v790, 1.442695
      %v817 = vpow.pop %v816
      %v818 = vmul.f32 %v791, 1.442695
      %v819 = vpow.pop %v818
      %v820 = vmul.f32 %v792, 1.442695
      %v821 = vpow.pop %v820
      %v822 = vmul.f32 %v793, 1.442695
      %v823 = vpow.pop %v822
      %v824 = vmul.f32 %v794, 1.442695
      %v825 = vpow.pop %v824
      %v826 = vmul.f32 %v795, 1.442695
      %v827 = vpow.pop %v826
      %v828 = vadd.f32 %v797, 2.0
      %v829 = vadd.f32 %v799, 2.0
      %v830 = vadd.f32 %v801, 2.0
      %v831 = vadd.f32 %v803, 2.0
      %v832 = vadd.f32 %v805, 2.0
      %v833 = vadd.f32 %v807, 2.0
      %v834 = vadd.f32 %v809, 2.0
      %v835 = vadd.f32 %v811, 2.0
      %v836 = vadd.f32 %v813, 2.0
      %v837 = vadd.f32 %v815, 2.0
      %v838 = vadd.f32 %v817, 2.0
      %v839 = vadd.f32 %v819, 2.0
      %v840 = vadd.f32 %v821, 2.0
      %v841 = vadd.f32 %v823, 2.0
      %v842 = vadd.f32 %v825, 2.0
      %v843 = vadd.f32 %v827, 2.0
      %v844 = vmul.f32 %v797, %v828
      %v845 = vmul.f32 %v799, %v829
      %v846 = vmul.f32 %v801, %v830
      %v847 = vmul.f32 %v803, %v831
      %v848 = vmul.f32 %v805, %v832
      %v849 = vmul.f32 %v807, %v833
      %v850 = vmul.f32 %v809, %v834
      %v851 = vmul.f32 %v811, %v835
      %v852 = vmul.f32 %v813, %v836
      %v853 = vmul.f32 %v815, %v837
      %v854 = vmul.f32 %v817, %v838
      %v855 = vmul.f32 %v819, %v839
      %v856 = vmul.f32 %v821, %v840
      %v857 = vmul.f32 %v823, %v841
      %v858 = vmul.f32 %v825, %v842
      %v859 = vmul.f32 %v827, %v843
      %vm860 = vcmp.gt.f32.partialorder %v764, 20.0
      %vm861 = vcmp.gt.f32.partialorder %v765, 20.0
      %vm862 = vcmp.gt.f32.partialorder %v766, 20.0
      %vm863 = vcmp.gt.f32.partialorder %v767, 20.0
      %vm864 = vcmp.gt.f32.partialorder %v768, 20.0
      %vm865 = vcmp.gt.f32.partialorder %v769, 20.0
      %vm866 = vcmp.gt.f32.partialorder %v770, 20.0
      %vm867 = vcmp.gt.f32.partialorder %v771, 20.0
      %vm868 = vcmp.gt.f32.partialorder %v772, 20.0
      %vm869 = vcmp.gt.f32.partialorder %v773, 20.0
      %vm870 = vcmp.gt.f32.partialorder %v774, 20.0
      %vm871 = vcmp.gt.f32.partialorder %v775, 20.0
      %vm872 = vcmp.gt.f32.partialorder %v776, 20.0
      %vm873 = vcmp.gt.f32.partialorder %v777, 20.0
      %vm874 = vcmp.gt.f32.partialorder %v778, 20.0
      %vm875 = vcmp.gt.f32.partialorder %v779, 20.0
      %v876 = vadd.f32 %v844, 2.0
      %v877 = vadd.f32 %v845, 2.0
      %v878 = vadd.f32 %v846, 2.0
      %v879 = vadd.f32 %v847, 2.0
      %v880 = vadd.f32 %v848, 2.0
      %v881 = vadd.f32 %v849, 2.0
      %v882 = vadd.f32 %v850, 2.0
      %v883 = vadd.f32 %v851, 2.0
      %v884 = vadd.f32 %v852, 2.0
      %v885 = vadd.f32 %v853, 2.0
      %v886 = vadd.f32 %v854, 2.0
      %v887 = vadd.f32 %v855, 2.0
      %v888 = vadd.f32 %v856, 2.0
      %v889 = vadd.f32 %v857, 2.0
      %v890 = vadd.f32 %v858, 2.0
      %v891 = vadd.f32 %v859, 2.0
      %v892 = vrcp.pop %v876
      %v893 = vmul.f32 %v844, %v892
      %v894 = vrcp.pop %v877
      %v895 = vmul.f32 %v845, %v894
      %v896 = vrcp.pop %v878
      %v897 = vmul.f32 %v846, %v896
      %v898 = vrcp.pop %v879
      %v899 = vmul.f32 %v847, %v898
      %v900 = vrcp.pop %v880
      %v901 = vmul.f32 %v848, %v900
      %v902 = vrcp.pop %v881
      %v903 = vmul.f32 %v849, %v902
      %v904 = vrcp.pop %v882
      %v905 = vmul.f32 %v850, %v904
      %v906 = vrcp.pop %v883
      %v907 = vmul.f32 %v851, %v906
      %v908 = vrcp.pop %v884
      %v909 = vmul.f32 %v852, %v908
      %v910 = vrcp.pop %v885
      %v911 = vmul.f32 %v853, %v910
      %v912 = vrcp.pop %v886
      %v913 = vmul.f32 %v854, %v912
      %v914 = vrcp.pop %v887
      %v915 = vmul.f32 %v855, %v914
      %v916 = vrcp.pop %v888
      %v917 = vmul.f32 %v856, %v916
      %v918 = vrcp.pop %v889
      %v919 = vmul.f32 %v857, %v918
      %v920 = vrcp.pop %v890
      %v921 = vmul.f32 %v858, %v920
      %v922 = vrcp.pop %v891
      %v923 = vmul.f32 %v859, %v922
      %v924 = vmul.f32 %v764, %v893
      %v925 = vmul.f32 %v765, %v895
      %v926 = vmul.f32 %v766, %v897
      %v927 = vmul.f32 %v767, %v899
      %v928 = vmul.f32 %v768, %v901
      %v929 = vmul.f32 %v769, %v903
      %v930 = vmul.f32 %v770, %v905
      %v931 = vmul.f32 %v771, %v907
      %v932 = vmul.f32 %v772, %v909
      %v933 = vmul.f32 %v773, %v911
      %v934 = vmul.f32 %v774, %v913
      %v935 = vmul.f32 %v775, %v915
      %v936 = vmul.f32 %v776, %v917
      %v937 = vmul.f32 %v777, %v919
      %v938 = vmul.f32 %v778, %v921
      %v939 = vmul.f32 %v779, %v923
      %v940 = vsel %vm860, %v764, %v924
      %v941 = vsel %vm861, %v765, %v925
      %v942 = vsel %vm862, %v766, %v926
      %v943 = vsel %vm863, %v767, %v927
      %v944 = vsel %vm864, %v768, %v928
      %v945 = vsel %vm865, %v769, %v929
      %v946 = vsel %vm866, %v770, %v930
      %v947 = vsel %vm867, %v771, %v931
      %v948 = vsel %vm868, %v772, %v932
      %v949 = vsel %vm869, %v773, %v933
      %v950 = vsel %vm870, %v774, %v934
      %v951 = vsel %vm871, %v775, %v935
      %v952 = vsel %vm872, %v776, %v936
      %v953 = vsel %vm873, %v777, %v937
      %v954 = vsel %vm874, %v778, %v938
      %v955 = vsel %vm875, %v779, %v939
      %s956 = scalar_lea.vmem %s1, 16
      %v957 = vld [vmem:[%s956] sm:$0xf]
      %v958 = vld [vmem:[%s956 + $0x4] sm:$0xf]
      %v959 = vld [vmem:[%s956 + $0x8] sm:$0xf]
      %v960 = vld [vmem:[%s956 + $0xc] sm:$0xf]
      %s961 = scalar_lea.vmem %s2, 4
      %v962 = vld [vmem:[%s961] sm:$0x7]
      %v963 = vpack.c.bf16 %v941, %v940
      %v964 = vpack.c.bf16 %v943, %v942
      %v965 = vpack.c.bf16 %v945, %v944
      %v966 = vpack.c.bf16 %v947, %v946
      %v967 = vpack.c.bf16 %v949, %v948
      %v968 = vpack.c.bf16 %v951, %v950
      %v969 = vpack.c.bf16 %v953, %v952
      %v970 = vpack.c.bf16 %v955, %v954
      %v971 = vlaneseq
      %v972 = vshrl.u32 %v971, 7
      %v973 = vsub.s32 0, %v972
      %v974 = vrot.slane %v962, %v973
      %v979 = vunpack.c.l.b16 %v957
      %v980 = vunpack.c.l.b16 %v958
      %v981 = vunpack.c.l.b16 %v959
      %v982 = vunpack.c.l.b16 %v960
      %v983 = vpack.c.b16 %v980, %v979
      %v984 = vpack.c.b16 %v982, %v981
      %v988 = vsel %vm482, %v963, 0
      %v991 = vsel %vm482, %v964, 0
      %v994 = vsel %vm482, %v965, 0
      %v997 = vsel %vm482, %v966, 0
      %v1000 = vsel %vm482, %v967, 0
      %v1003 = vsel %vm482, %v968, 0
      %v1006 = vsel %vm482, %v969, 0
      %v1009 = vsel %vm482, %v970, 0
      %1011 = vmatprep.subr.bf16.mxu0 0
      %1012 = vmatpush1.bf16.msra.mxu0 %v983
      %1013 = vmatprep.subr.bf16.mxu0 0
      %1014 = vmatpush1.bf16.msra.mxu0 %v984
      %1015 = vmatprep.subr.bf16.mxu0 0
      %1016 = vmatpush1.bf16.msra.mxu0 0
      %1017 = vmatprep.subr.bf16.mxu0 0
      %1018 = vmatpush1.bf16.msra.mxu0 0
      %1019 = vmatprep.subr.bf16.mxu0 0
      %1020 = vmatpush1.bf16.msra.mxu0 0
      %1021 = vmatprep.subr.bf16.mxu0 0
      %1022 = vmatpush1.bf16.msra.mxu0 0
      %1023 = vmatprep.subr.bf16.mxu0 0
      %1024 = vmatpush1.bf16.msra.mxu0 0
      %1025 = vmatprep.subr.bf16.mxu0 0
      %1026 = vmatpush1.bf16.msra.mxu0 0
      %1027 = vmatprep.subr.bf16.mxu0 0
      %1028 = vmatpush1.bf16.msra.mxu0 0
      %1029 = vmatprep.subr.bf16.mxu0 0
      %1030 = vmatpush1.bf16.msra.mxu0 0
      %1031 = vmatprep.subr.bf16.mxu0 0
      %1032 = vmatpush1.bf16.msra.mxu0 0
      %1033 = vmatprep.subr.bf16.mxu0 0
      %1034 = vmatpush1.bf16.msra.mxu0 0
      %1035 = vmatprep.subr.bf16.mxu0 0
      %1036 = vmatpush1.bf16.msra.mxu0 0
      %1037 = vmatprep.subr.bf16.mxu0 0
      %1038 = vmatpush1.bf16.msra.mxu0 0
      %1039 = vmatprep.subr.bf16.mxu0 0
      %1040 = vmatpush1.bf16.msra.mxu0 0
      %1041 = vmatprep.subr.bf16.mxu0 0
      %1042 = vmatpush1.bf16.msra.mxu0 0
      %1043 = vmatprep.mubr.bf16.mxu0 0
      %1044 = vmatmul.mubr.bf16.gmra.mrb[0].mxu0 %v988
      %v1045 = vpop.f32.mrb[0].mxu0
      %v1046 = vadd.f32 %v974, %v1045
      %v1047 = vpop.f32.mrb[0].mxu0
      %v1048 = vpop.f32.mrb[0].mxu0
      %v1049 = vadd.f32 %v974, %v1048
      %v1050 = vpop.f32.mrb[0].mxu0
      %1051 = vmatprep.mubr.bf16.mxu0 0
      %1052 = vmatmul.mubr.bf16.gmra.mrb[0].mxu0 %v991
      %v1053 = vpop.f32.mrb[0].mxu0
      %v1054 = vadd.f32 %v974, %v1053
      %v1055 = vpop.f32.mrb[0].mxu0
      %v1056 = vpop.f32.mrb[0].mxu0
      %v1057 = vadd.f32 %v974, %v1056
      %v1058 = vpop.f32.mrb[0].mxu0
      %1059 = vmatprep.mubr.bf16.mxu0 0
      %1060 = vmatmul.mubr.bf16.gmra.mrb[0].mxu0 %v994
      %v1061 = vpop.f32.mrb[0].mxu0
      %v1062 = vadd.f32 %v974, %v1061
      %v1063 = vpop.f32.mrb[0].mxu0
      %v1064 = vpop.f32.mrb[0].mxu0
      %v1065 = vadd.f32 %v974, %v1064
      %v1066 = vpop.f32.mrb[0].mxu0
      %1067 = vmatprep.mubr.bf16.mxu0 0
      %1068 = vmatmul.mubr.bf16.gmra.mrb[0].mxu0 %v997
      %v1069 = vpop.f32.mrb[0].mxu0
      %v1070 = vadd.f32 %v974, %v1069
      %v1071 = vpop.f32.mrb[0].mxu0
      %v1072 = vpop.f32.mrb[0].mxu0
      %v1073 = vadd.f32 %v974, %v1072
      %v1074 = vpop.f32.mrb[0].mxu0
      %1075 = vmatprep.mubr.bf16.mxu0 0
      %1076 = vmatmul.mubr.bf16.gmra.mrb[0].mxu0 %v1000
      %v1077 = vpop.f32.mrb[0].mxu0
      %v1078 = vadd.f32 %v974, %v1077
      %v1079 = vpop.f32.mrb[0].mxu0
      %v1080 = vpop.f32.mrb[0].mxu0
      %v1081 = vadd.f32 %v974, %v1080
      %v1082 = vpop.f32.mrb[0].mxu0
      %1083 = vmatprep.mubr.bf16.mxu0 0
      %1084 = vmatmul.mubr.bf16.gmra.mrb[0].mxu0 %v1003
      %v1085 = vpop.f32.mrb[0].mxu0
      %v1086 = vadd.f32 %v974, %v1085
      %v1087 = vpop.f32.mrb[0].mxu0
      %v1088 = vpop.f32.mrb[0].mxu0
      %v1089 = vadd.f32 %v974, %v1088
      %v1090 = vpop.f32.mrb[0].mxu0
      %1091 = vmatprep.mubr.bf16.mxu0 0
      %1092 = vmatmul.mubr.bf16.gmra.mrb[0].mxu0 %v1006
      %v1093 = vpop.f32.mrb[0].mxu0
      %v1094 = vadd.f32 %v974, %v1093
      %v1095 = vpop.f32.mrb[0].mxu0
      %v1096 = vpop.f32.mrb[0].mxu0
      %v1097 = vadd.f32 %v974, %v1096
      %v1098 = vpop.f32.mrb[0].mxu0
      %1099 = vmatprep.mubr.bf16.mxu0 0
      %1100 = vmatmul.mubr.bf16.gmra.mrb[0].mxu0 %v1009
      %v1101 = vpop.f32.mrb[0].mxu0
      %v1102 = vadd.f32 %v974, %v1101
      %v1103 = vpop.f32.mrb[0].mxu0
      %v1104 = vpop.f32.mrb[0].mxu0
      %v1105 = vadd.f32 %v974, %v1104
      %v1106 = vpop.f32.mrb[0].mxu0
      %1107 = vdwg.mxu0
      %v1108 = vsel %vm482, %v1046, 0.0
      %1109 = vadd.xlane.f32.xlu0 %v1108
      %v1110 = vpop.xlane.xlu0 %1109
      %v1111 = vsel %vm482, %v1049, 0.0
      %1112 = vadd.xlane.f32.xlu0 %v1111
      %v1113 = vpop.xlane.xlu0 %1112
      %v1114 = vsel %vm482, %v1054, 0.0
      %1115 = vadd.xlane.f32.xlu0 %v1114
      %v1116 = vpop.xlane.xlu0 %1115
      %v1117 = vsel %vm482, %v1057, 0.0
      %1118 = vadd.xlane.f32.xlu0 %v1117
      %v1119 = vpop.xlane.xlu0 %1118
      %v1120 = vsel %vm482, %v1062, 0.0
      %1121 = vadd.xlane.f32.xlu0 %v1120
      %v1122 = vpop.xlane.xlu0 %1121
      %v1123 = vsel %vm482, %v1065, 0.0
      %1124 = vadd.xlane.f32.xlu0 %v1123
      %v1125 = vpop.xlane.xlu0 %1124
      %v1126 = vsel %vm482, %v1070, 0.0
      %1127 = vadd.xlane.f32.xlu0 %v1126
      %v1128 = vpop.xlane.xlu0 %1127
      %v1129 = vsel %vm482, %v1073, 0.0
      %1130 = vadd.xlane.f32.xlu0 %v1129
      %v1131 = vpop.xlane.xlu0 %1130
      %v1132 = vsel %vm482, %v1078, 0.0
      %1133 = vadd.xlane.f32.xlu0 %v1132
      %v1134 = vpop.xlane.xlu0 %1133
      %v1135 = vsel %vm482, %v1081, 0.0
      %1136 = vadd.xlane.f32.xlu0 %v1135
      %v1137 = vpop.xlane.xlu0 %1136
      %v1138 = vsel %vm482, %v1086, 0.0
      %1139 = vadd.xlane.f32.xlu0 %v1138
      %v1140 = vpop.xlane.xlu0 %1139
      %v1141 = vsel %vm482, %v1089, 0.0
      %1142 = vadd.xlane.f32.xlu0 %v1141
      %v1143 = vpop.xlane.xlu0 %1142
      %v1144 = vsel %vm482, %v1094, 0.0
      %1145 = vadd.xlane.f32.xlu0 %v1144
      %v1146 = vpop.xlane.xlu0 %1145
      %v1147 = vsel %vm482, %v1097, 0.0
      %1148 = vadd.xlane.f32.xlu0 %v1147
      %v1149 = vpop.xlane.xlu0 %1148
      %v1150 = vsel %vm482, %v1102, 0.0
      %1151 = vadd.xlane.f32.xlu0 %v1150
      %v1152 = vpop.xlane.xlu0 %1151
      %v1153 = vsel %vm482, %v1105, 0.0
      %1154 = vadd.xlane.f32.xlu0 %v1153
      %v1155 = vpop.xlane.xlu0 %1154
      %v1156 = vmul.f32 %v1110, %v531
      %v1157 = vmul.f32 %v1113, %v531
      %v1158 = vmul.f32 %v1116, %v531
      %v1159 = vmul.f32 %v1119, %v531
      %v1160 = vmul.f32 %v1122, %v531
      %v1161 = vmul.f32 %v1125, %v531
      %v1162 = vmul.f32 %v1128, %v531
      %v1163 = vmul.f32 %v1131, %v531
      %v1164 = vmul.f32 %v1134, %v531
      %v1165 = vmul.f32 %v1137, %v531
      %v1166 = vmul.f32 %v1140, %v531
      %v1167 = vmul.f32 %v1143, %v531
      %v1168 = vmul.f32 %v1146, %v531
      %v1169 = vmul.f32 %v1149, %v531
      %v1170 = vmul.f32 %v1152, %v531
      %v1171 = vmul.f32 %v1155, %v531
      %v1172 = vmul.f32 %v1046, %v1046
      %v1173 = vmul.f32 %v1049, %v1049
      %v1174 = vmul.f32 %v1054, %v1054
      %v1175 = vmul.f32 %v1057, %v1057
      %v1176 = vmul.f32 %v1062, %v1062
      %v1177 = vmul.f32 %v1065, %v1065
      %v1178 = vmul.f32 %v1070, %v1070
      %v1179 = vmul.f32 %v1073, %v1073
      %v1180 = vmul.f32 %v1078, %v1078
      %v1181 = vmul.f32 %v1081, %v1081
      %v1182 = vmul.f32 %v1086, %v1086
      %v1183 = vmul.f32 %v1089, %v1089
      %v1184 = vmul.f32 %v1094, %v1094
      %v1185 = vmul.f32 %v1097, %v1097
      %v1186 = vmul.f32 %v1102, %v1102
      %v1187 = vmul.f32 %v1105, %v1105
      %v1188 = vsel %vm482, %v1172, 0.0
      %1189 = vadd.xlane.f32.xlu0 %v1188
      %v1190 = vpop.xlane.xlu0 %1189
      %v1191 = vsel %vm482, %v1173, 0.0
      %1192 = vadd.xlane.f32.xlu0 %v1191
      %v1193 = vpop.xlane.xlu0 %1192
      %v1194 = vsel %vm482, %v1174, 0.0
      %1195 = vadd.xlane.f32.xlu0 %v1194
      %v1196 = vpop.xlane.xlu0 %1195
      %v1197 = vsel %vm482, %v1175, 0.0
      %1198 = vadd.xlane.f32.xlu0 %v1197
      %v1199 = vpop.xlane.xlu0 %1198
      %v1200 = vsel %vm482, %v1176, 0.0
      %1201 = vadd.xlane.f32.xlu0 %v1200
      %v1202 = vpop.xlane.xlu0 %1201
      %v1203 = vsel %vm482, %v1177, 0.0
      %1204 = vadd.xlane.f32.xlu0 %v1203
      %v1205 = vpop.xlane.xlu0 %1204
      %v1206 = vsel %vm482, %v1178, 0.0
      %1207 = vadd.xlane.f32.xlu0 %v1206
      %v1208 = vpop.xlane.xlu0 %1207
      %v1209 = vsel %vm482, %v1179, 0.0
      %1210 = vadd.xlane.f32.xlu0 %v1209
      %v1211 = vpop.xlane.xlu0 %1210
      %v1212 = vsel %vm482, %v1180, 0.0
      %1213 = vadd.xlane.f32.xlu0 %v1212
      %v1214 = vpop.xlane.xlu0 %1213
      %v1215 = vsel %vm482, %v1181, 0.0
      %1216 = vadd.xlane.f32.xlu0 %v1215
      %v1217 = vpop.xlane.xlu0 %1216
      %v1218 = vsel %vm482, %v1182, 0.0
      %1219 = vadd.xlane.f32.xlu0 %v1218
      %v1220 = vpop.xlane.xlu0 %1219
      %v1221 = vsel %vm482, %v1183, 0.0
      %1222 = vadd.xlane.f32.xlu0 %v1221
      %v1223 = vpop.xlane.xlu0 %1222
      %v1224 = vsel %vm482, %v1184, 0.0
      %1225 = vadd.xlane.f32.xlu0 %v1224
      %v1226 = vpop.xlane.xlu0 %1225
      %v1227 = vsel %vm482, %v1185, 0.0
      %1228 = vadd.xlane.f32.xlu0 %v1227
      %v1229 = vpop.xlane.xlu0 %1228
      %v1230 = vsel %vm482, %v1186, 0.0
      %1231 = vadd.xlane.f32.xlu0 %v1230
      %v1232 = vpop.xlane.xlu0 %1231
      %v1233 = vsel %vm482, %v1187, 0.0
      %1234 = vadd.xlane.f32.xlu0 %v1233
      %v1235 = vpop.xlane.xlu0 %1234
      %v1236 = vmul.f32 %v1190, %v531
      %v1237 = vmul.f32 %v1193, %v531
      %v1238 = vmul.f32 %v1196, %v531
      %v1239 = vmul.f32 %v1199, %v531
      %v1240 = vmul.f32 %v1202, %v531
      %v1241 = vmul.f32 %v1205, %v531
      %v1242 = vmul.f32 %v1208, %v531
      %v1243 = vmul.f32 %v1211, %v531
      %v1244 = vmul.f32 %v1214, %v531
      %v1245 = vmul.f32 %v1217, %v531
      %v1246 = vmul.f32 %v1220, %v531
      %v1247 = vmul.f32 %v1223, %v531
      %v1248 = vmul.f32 %v1226, %v531
      %v1249 = vmul.f32 %v1229, %v531
      %v1250 = vmul.f32 %v1232, %v531
      %v1251 = vmul.f32 %v1235, %v531
      %v1252 = vmul.f32 %v1156, %v1156
      %v1253 = vmul.f32 %v1157, %v1157
      %v1254 = vmul.f32 %v1158, %v1158
      %v1255 = vmul.f32 %v1159, %v1159
      %v1256 = vmul.f32 %v1160, %v1160
      %v1257 = vmul.f32 %v1161, %v1161
      %v1258 = vmul.f32 %v1162, %v1162
      %v1259 = vmul.f32 %v1163, %v1163
      %v1260 = vmul.f32 %v1164, %v1164
      %v1261 = vmul.f32 %v1165, %v1165
      %v1262 = vmul.f32 %v1166, %v1166
      %v1263 = vmul.f32 %v1167, %v1167
      %v1264 = vmul.f32 %v1168, %v1168
      %v1265 = vmul.f32 %v1169, %v1169
      %v1266 = vmul.f32 %v1170, %v1170
      %v1267 = vmul.f32 %v1171, %v1171
      %v1268 = vsub.f32 %v1236, %v1252
      %v1269 = vsub.f32 %v1237, %v1253
      %v1270 = vsub.f32 %v1238, %v1254
      %v1271 = vsub.f32 %v1239, %v1255
      %v1272 = vsub.f32 %v1240, %v1256
      %v1273 = vsub.f32 %v1241, %v1257
      %v1274 = vsub.f32 %v1242, %v1258
      %v1275 = vsub.f32 %v1243, %v1259
      %v1276 = vsub.f32 %v1244, %v1260
      %v1277 = vsub.f32 %v1245, %v1261
      %v1278 = vsub.f32 %v1246, %v1262
      %v1279 = vsub.f32 %v1247, %v1263
      %v1280 = vsub.f32 %v1248, %v1264
      %v1281 = vsub.f32 %v1249, %v1265
      %v1282 = vsub.f32 %v1250, %v1266
      %v1283 = vsub.f32 %v1251, %v1267
      %v1284 = vmax.f32 %v1268, 0.0
      %v1285 = vmax.f32 %v1269, 0.0
      %v1286 = vmax.f32 %v1270, 0.0
      %v1287 = vmax.f32 %v1271, 0.0
      %v1288 = vmax.f32 %v1272, 0.0
      %v1289 = vmax.f32 %v1273, 0.0
      %v1290 = vmax.f32 %v1274, 0.0
      %v1291 = vmax.f32 %v1275, 0.0
      %v1292 = vmax.f32 %v1276, 0.0
      %v1293 = vmax.f32 %v1277, 0.0
      %v1294 = vmax.f32 %v1278, 0.0
      %v1295 = vmax.f32 %v1279, 0.0
      %v1296 = vmax.f32 %v1280, 0.0
      %v1297 = vmax.f32 %v1281, 0.0
      %v1298 = vmax.f32 %v1282, 0.0
      %v1299 = vmax.f32 %v1283, 0.0
      %v1300 = vsub.f32 %v1046, %v1156
      %v1301 = vsub.f32 %v1049, %v1157
      %v1302 = vsub.f32 %v1054, %v1158
      %v1303 = vsub.f32 %v1057, %v1159
      %v1304 = vsub.f32 %v1062, %v1160
      %v1305 = vsub.f32 %v1065, %v1161
      %v1306 = vsub.f32 %v1070, %v1162
      %v1307 = vsub.f32 %v1073, %v1163
      %v1308 = vsub.f32 %v1078, %v1164
      %v1309 = vsub.f32 %v1081, %v1165
      %v1310 = vsub.f32 %v1086, %v1166
      %v1311 = vsub.f32 %v1089, %v1167
      %v1312 = vsub.f32 %v1094, %v1168
      %v1313 = vsub.f32 %v1097, %v1169
      %v1314 = vsub.f32 %v1102, %v1170
      %v1315 = vsub.f32 %v1105, %v1171
      %v1316 = vadd.f32 %v1284, 1e-05
      %v1317 = vadd.f32 %v1285, 1e-05
      %v1318 = vadd.f32 %v1286, 1e-05
      %v1319 = vadd.f32 %v1287, 1e-05
      %v1320 = vadd.f32 %v1288, 1e-05
      %v1321 = vadd.f32 %v1289, 1e-05
      %v1322 = vadd.f32 %v1290, 1e-05
      %v1323 = vadd.f32 %v1291, 1e-05
      %v1324 = vadd.f32 %v1292, 1e-05
      %v1325 = vadd.f32 %v1293, 1e-05
      %v1326 = vadd.f32 %v1294, 1e-05
      %v1327 = vadd.f32 %v1295, 1e-05
      %v1328 = vadd.f32 %v1296, 1e-05
      %v1329 = vadd.f32 %v1297, 1e-05
      %v1330 = vadd.f32 %v1298, 1e-05
      %v1331 = vadd.f32 %v1299, 1e-05
      %v1332 = vrsqrt.pop %v1316
      %v1333 = vrsqrt.pop %v1317
      %v1334 = vrsqrt.pop %v1318
      %v1335 = vrsqrt.pop %v1319
      %v1336 = vrsqrt.pop %v1320
      %v1337 = vrsqrt.pop %v1321
      %v1338 = vrsqrt.pop %v1322
      %v1339 = vrsqrt.pop %v1323
      %v1340 = vrsqrt.pop %v1324
      %v1341 = vrsqrt.pop %v1325
      %v1342 = vrsqrt.pop %v1326
      %v1343 = vrsqrt.pop %v1327
      %v1344 = vrsqrt.pop %v1328
      %v1345 = vrsqrt.pop %v1329
      %v1346 = vrsqrt.pop %v1330
      %v1347 = vrsqrt.pop %v1331
      %v1348 = vmul.f32 %v1300, %v1332
      %v1349 = vmul.f32 %v1301, %v1333
      %v1350 = vmul.f32 %v1302, %v1334
      %v1351 = vmul.f32 %v1303, %v1335
      %v1352 = vmul.f32 %v1304, %v1336
      %v1353 = vmul.f32 %v1305, %v1337
      %v1354 = vmul.f32 %v1306, %v1338
      %v1355 = vmul.f32 %v1307, %v1339
      %v1356 = vmul.f32 %v1308, %v1340
      %v1357 = vmul.f32 %v1309, %v1341
      %v1358 = vmul.f32 %v1310, %v1342
      %v1359 = vmul.f32 %v1311, %v1343
      %v1360 = vmul.f32 %v1312, %v1344
      %v1361 = vmul.f32 %v1313, %v1345
      %v1362 = vmul.f32 %v1314, %v1346
      %v1363 = vmul.f32 %v1315, %v1347
      %v1364 = vlaneseq
      %v1365 = vshrl.u32 %v1364, 7
      %v1366 = vsub.s32 1, %v1365
      %v1367 = vrot.slane %v962, %v1366
      %v1368 = vmul.f32 %v1348, %v1367
      %v1369 = vmul.f32 %v1349, %v1367
      %v1370 = vmul.f32 %v1350, %v1367
      %v1371 = vmul.f32 %v1351, %v1367
      %v1372 = vmul.f32 %v1352, %v1367
      %v1373 = vmul.f32 %v1353, %v1367
      %v1374 = vmul.f32 %v1354, %v1367
      %v1375 = vmul.f32 %v1355, %v1367
      %v1376 = vmul.f32 %v1356, %v1367
      %v1377 = vmul.f32 %v1357, %v1367
      %v1378 = vmul.f32 %v1358, %v1367
      %v1379 = vmul.f32 %v1359, %v1367
      %v1380 = vmul.f32 %v1360, %v1367
      %v1381 = vmul.f32 %v1361, %v1367
      %v1382 = vmul.f32 %v1362, %v1367
      %v1383 = vmul.f32 %v1363, %v1367
      %v1384 = vlaneseq
      %v1385 = vshrl.u32 %v1384, 7
      %v1386 = vsub.s32 2, %v1385
      %v1387 = vrot.slane %v962, %v1386
      %v1388 = vadd.f32 %v1368, %v1387
      %v1389 = vadd.f32 %v1369, %v1387
      %v1390 = vadd.f32 %v1370, %v1387
      %v1391 = vadd.f32 %v1371, %v1387
      %v1392 = vadd.f32 %v1372, %v1387
      %v1393 = vadd.f32 %v1373, %v1387
      %v1394 = vadd.f32 %v1374, %v1387
      %v1395 = vadd.f32 %v1375, %v1387
      %v1396 = vadd.f32 %v1376, %v1387
      %v1397 = vadd.f32 %v1377, %v1387
      %v1398 = vadd.f32 %v1378, %v1387
      %v1399 = vadd.f32 %v1379, %v1387
      %v1400 = vadd.f32 %v1380, %v1387
      %v1401 = vadd.f32 %v1381, %v1387
      %v1402 = vadd.f32 %v1382, %v1387
      %v1403 = vadd.f32 %v1383, %v1387
      %v1404 = vmin.f32 %v1388, 20.0
      %v1405 = vmin.f32 %v1389, 20.0
      %v1406 = vmin.f32 %v1390, 20.0
      %v1407 = vmin.f32 %v1391, 20.0
      %v1408 = vmin.f32 %v1392, 20.0
      %v1409 = vmin.f32 %v1393, 20.0
      %v1410 = vmin.f32 %v1394, 20.0
      %v1411 = vmin.f32 %v1395, 20.0
      %v1412 = vmin.f32 %v1396, 20.0
      %v1413 = vmin.f32 %v1397, 20.0
      %v1414 = vmin.f32 %v1398, 20.0
      %v1415 = vmin.f32 %v1399, 20.0
      %v1416 = vmin.f32 %v1400, 20.0
      %v1417 = vmin.f32 %v1401, 20.0
      %v1418 = vmin.f32 %v1402, 20.0
      %v1419 = vmin.f32 %v1403, 20.0
      %v1420 = vmul.f32 %v1404, 1.442695
      %v1421 = vpow.pop %v1420
      %v1422 = vmul.f32 %v1405, 1.442695
      %v1423 = vpow.pop %v1422
      %v1424 = vmul.f32 %v1406, 1.442695
      %v1425 = vpow.pop %v1424
      %v1426 = vmul.f32 %v1407, 1.442695
      %v1427 = vpow.pop %v1426
      %v1428 = vmul.f32 %v1408, 1.442695
      %v1429 = vpow.pop %v1428
      %v1430 = vmul.f32 %v1409, 1.442695
      %v1431 = vpow.pop %v1430
      %v1432 = vmul.f32 %v1410, 1.442695
      %v1433 = vpow.pop %v1432
      %v1434 = vmul.f32 %v1411, 1.442695
      %v1435 = vpow.pop %v1434
      %v1436 = vmul.f32 %v1412, 1.442695
      %v1437 = vpow.pop %v1436
      %v1438 = vmul.f32 %v1413, 1.442695
      %v1439 = vpow.pop %v1438
      %v1440 = vmul.f32 %v1414, 1.442695
      %v1441 = vpow.pop %v1440
      %v1442 = vmul.f32 %v1415, 1.442695
      %v1443 = vpow.pop %v1442
      %v1444 = vmul.f32 %v1416, 1.442695
      %v1445 = vpow.pop %v1444
      %v1446 = vmul.f32 %v1417, 1.442695
      %v1447 = vpow.pop %v1446
      %v1448 = vmul.f32 %v1418, 1.442695
      %v1449 = vpow.pop %v1448
      %v1450 = vmul.f32 %v1419, 1.442695
      %v1451 = vpow.pop %v1450
      %v1452 = vadd.f32 %v1421, 2.0
      %v1453 = vadd.f32 %v1423, 2.0
      %v1454 = vadd.f32 %v1425, 2.0
      %v1455 = vadd.f32 %v1427, 2.0
      %v1456 = vadd.f32 %v1429, 2.0
      %v1457 = vadd.f32 %v1431, 2.0
      %v1458 = vadd.f32 %v1433, 2.0
      %v1459 = vadd.f32 %v1435, 2.0
      %v1460 = vadd.f32 %v1437, 2.0
      %v1461 = vadd.f32 %v1439, 2.0
      %v1462 = vadd.f32 %v1441, 2.0
      %v1463 = vadd.f32 %v1443, 2.0
      %v1464 = vadd.f32 %v1445, 2.0
      %v1465 = vadd.f32 %v1447, 2.0
      %v1466 = vadd.f32 %v1449, 2.0
      %v1467 = vadd.f32 %v1451, 2.0
      %v1468 = vmul.f32 %v1421, %v1452
      %v1469 = vmul.f32 %v1423, %v1453
      %v1470 = vmul.f32 %v1425, %v1454
      %v1471 = vmul.f32 %v1427, %v1455
      %v1472 = vmul.f32 %v1429, %v1456
      %v1473 = vmul.f32 %v1431, %v1457
      %v1474 = vmul.f32 %v1433, %v1458
      %v1475 = vmul.f32 %v1435, %v1459
      %v1476 = vmul.f32 %v1437, %v1460
      %v1477 = vmul.f32 %v1439, %v1461
      %v1478 = vmul.f32 %v1441, %v1462
      %v1479 = vmul.f32 %v1443, %v1463
      %v1480 = vmul.f32 %v1445, %v1464
      %v1481 = vmul.f32 %v1447, %v1465
      %v1482 = vmul.f32 %v1449, %v1466
      %v1483 = vmul.f32 %v1451, %v1467
      %vm1484 = vcmp.gt.f32.partialorder %v1388, 20.0
      %vm1485 = vcmp.gt.f32.partialorder %v1389, 20.0
      %vm1486 = vcmp.gt.f32.partialorder %v1390, 20.0
      %vm1487 = vcmp.gt.f32.partialorder %v1391, 20.0
      %vm1488 = vcmp.gt.f32.partialorder %v1392, 20.0
      %vm1489 = vcmp.gt.f32.partialorder %v1393, 20.0
      %vm1490 = vcmp.gt.f32.partialorder %v1394, 20.0
      %vm1491 = vcmp.gt.f32.partialorder %v1395, 20.0
      %vm1492 = vcmp.gt.f32.partialorder %v1396, 20.0
      %vm1493 = vcmp.gt.f32.partialorder %v1397, 20.0
      %vm1494 = vcmp.gt.f32.partialorder %v1398, 20.0
      %vm1495 = vcmp.gt.f32.partialorder %v1399, 20.0
      %vm1496 = vcmp.gt.f32.partialorder %v1400, 20.0
      %vm1497 = vcmp.gt.f32.partialorder %v1401, 20.0
      %vm1498 = vcmp.gt.f32.partialorder %v1402, 20.0
      %vm1499 = vcmp.gt.f32.partialorder %v1403, 20.0
      %v1500 = vadd.f32 %v1468, 2.0
      %v1501 = vadd.f32 %v1469, 2.0
      %v1502 = vadd.f32 %v1470, 2.0
      %v1503 = vadd.f32 %v1471, 2.0
      %v1504 = vadd.f32 %v1472, 2.0
      %v1505 = vadd.f32 %v1473, 2.0
      %v1506 = vadd.f32 %v1474, 2.0
      %v1507 = vadd.f32 %v1475, 2.0
      %v1508 = vadd.f32 %v1476, 2.0
      %v1509 = vadd.f32 %v1477, 2.0
      %v1510 = vadd.f32 %v1478, 2.0
      %v1511 = vadd.f32 %v1479, 2.0
      %v1512 = vadd.f32 %v1480, 2.0
      %v1513 = vadd.f32 %v1481, 2.0
      %v1514 = vadd.f32 %v1482, 2.0
      %v1515 = vadd.f32 %v1483, 2.0
      %v1516 = vrcp.pop %v1500
      %v1517 = vmul.f32 %v1468, %v1516
      %v1518 = vrcp.pop %v1501
      %v1519 = vmul.f32 %v1469, %v1518
      %v1520 = vrcp.pop %v1502
      %v1521 = vmul.f32 %v1470, %v1520
      %v1522 = vrcp.pop %v1503
      %v1523 = vmul.f32 %v1471, %v1522
      %v1524 = vrcp.pop %v1504
      %v1525 = vmul.f32 %v1472, %v1524
      %v1526 = vrcp.pop %v1505
      %v1527 = vmul.f32 %v1473, %v1526
      %v1528 = vrcp.pop %v1506
      %v1529 = vmul.f32 %v1474, %v1528
      %v1530 = vrcp.pop %v1507
      %v1531 = vmul.f32 %v1475, %v1530
      %v1532 = vrcp.pop %v1508
      %v1533 = vmul.f32 %v1476, %v1532
      %v1534 = vrcp.pop %v1509
      %v1535 = vmul.f32 %v1477, %v1534
      %v1536 = vrcp.pop %v1510
      %v1537 = vmul.f32 %v1478, %v1536
      %v1538 = vrcp.pop %v1511
      %v1539 = vmul.f32 %v1479, %v1538
      %v1540 = vrcp.pop %v1512
      %v1541 = vmul.f32 %v1480, %v1540
      %v1542 = vrcp.pop %v1513
      %v1543 = vmul.f32 %v1481, %v1542
      %v1544 = vrcp.pop %v1514
      %v1545 = vmul.f32 %v1482, %v1544
      %v1546 = vrcp.pop %v1515
      %v1547 = vmul.f32 %v1483, %v1546
      %v1548 = vmul.f32 %v1388, %v1517
      %v1549 = vmul.f32 %v1389, %v1519
      %v1550 = vmul.f32 %v1390, %v1521
      %v1551 = vmul.f32 %v1391, %v1523
      %v1552 = vmul.f32 %v1392, %v1525
      %v1553 = vmul.f32 %v1393, %v1527
      %v1554 = vmul.f32 %v1394, %v1529
      %v1555 = vmul.f32 %v1395, %v1531
      %v1556 = vmul.f32 %v1396, %v1533
      %v1557 = vmul.f32 %v1397, %v1535
      %v1558 = vmul.f32 %v1398, %v1537
      %v1559 = vmul.f32 %v1399, %v1539
      %v1560 = vmul.f32 %v1400, %v1541
      %v1561 = vmul.f32 %v1401, %v1543
      %v1562 = vmul.f32 %v1402, %v1545
      %v1563 = vmul.f32 %v1403, %v1547
      %v1564 = vsel %vm1484, %v1388, %v1548
      %v1565 = vsel %vm1485, %v1389, %v1549
      %v1566 = vsel %vm1486, %v1390, %v1550
      %v1567 = vsel %vm1487, %v1391, %v1551
      %v1568 = vsel %vm1488, %v1392, %v1552
      %v1569 = vsel %vm1489, %v1393, %v1553
      %v1570 = vsel %vm1490, %v1394, %v1554
      %v1571 = vsel %vm1491, %v1395, %v1555
      %v1572 = vsel %vm1492, %v1396, %v1556
      %v1573 = vsel %vm1493, %v1397, %v1557
      %v1574 = vsel %vm1494, %v1398, %v1558
      %v1575 = vsel %vm1495, %v1399, %v1559
      %v1576 = vsel %vm1496, %v1400, %v1560
      %v1577 = vsel %vm1497, %v1401, %v1561
      %v1578 = vsel %vm1498, %v1402, %v1562
      %v1579 = vsel %vm1499, %v1403, %v1563
      %v1580 = vld [vmem:[%s3] sm:$0xf]
      %v1581 = vld [vmem:[%s3 + $0x4] sm:$0xf]
      %v1582 = vld [vmem:[%s3 + $0x8] sm:$0xf]
      %v1583 = vld [vmem:[%s4] sm:$0x1]
      %v1585 = vlaneseq
      %v1586 = vshrl.u32 %v1585, 7
      %v1587 = vsub.s32 0, %v1586
      %v1588 = vrot.slane %v1583, %v1587
      %v1593 = vunpack.c.l.b16 %v1580
      %v1594 = vunpack.c.l.b16 %v1581
      %v1595 = vunpack.c.l.b16 %v1582
      %v1596 = vpack.c.b16 %v1594, %v1593
      %v1597 = vpack.c.b16 %v1595, %v1595
      %v1600 = vsel %vm381, %v1597, 0
      %1602 = vmatprep.subr.bf16.mxu0 0
      %1603 = vmatpush1.bf16.msra.mxu0 %v1596
      %1604 = vmatprep.subr.bf16.mxu0 0
      %1605 = vmatpush1.bf16.msra.mxu0 %v1600
      %1606 = vmatprep.subr.bf16.mxu0 0
      %1607 = vmatpush1.bf16.msra.mxu0 0
      %1608 = vmatprep.subr.bf16.mxu0 0
      %1609 = vmatpush1.bf16.msra.mxu0 0
      %1610 = vmatprep.subr.bf16.mxu0 0
      %1611 = vmatpush1.bf16.msra.mxu0 0
      %1612 = vmatprep.subr.bf16.mxu0 0
      %1613 = vmatpush1.bf16.msra.mxu0 0
      %1614 = vmatprep.subr.bf16.mxu0 0
      %1615 = vmatpush1.bf16.msra.mxu0 0
      %1616 = vmatprep.subr.bf16.mxu0 0
      %1617 = vmatpush1.bf16.msra.mxu0 0
      %1618 = vmatprep.subr.bf16.mxu0 0
      %1619 = vmatpush1.bf16.msra.mxu0 0
      %1620 = vmatprep.subr.bf16.mxu0 0
      %1621 = vmatpush1.bf16.msra.mxu0 0
      %1622 = vmatprep.subr.bf16.mxu0 0
      %1623 = vmatpush1.bf16.msra.mxu0 0
      %1624 = vmatprep.subr.bf16.mxu0 0
      %1625 = vmatpush1.bf16.msra.mxu0 0
      %1626 = vmatprep.subr.bf16.mxu0 0
      %1627 = vmatpush1.bf16.msra.mxu0 0
      %1628 = vmatprep.subr.bf16.mxu0 0
      %1629 = vmatpush1.bf16.msra.mxu0 0
      %1630 = vmatprep.subr.bf16.mxu0 0
      %1631 = vmatpush1.bf16.msra.mxu0 0
      %1632 = vmatprep.subr.bf16.mxu0 0
      %1633 = vmatpush1.bf16.msra.mxu0 0
      %1634 = vmatprep.mubr.bf16.mxu0 0
      %1635 = vmatmul.mubr.bf16.gmra.mrb[0].mxu0 %v358
      %v1636 = vpop.f32.mrb[0].mxu0
      %v1637 = vadd.f32 %v1588, %v1636
      %v1638 = vpop.f32.mrb[0].mxu0
      %v1639 = vpop.f32.mrb[0].mxu0
      %v1640 = vadd.f32 %v1588, %v1639
      %v1641 = vpop.f32.mrb[0].mxu0
      %1642 = vmatprep.mubr.bf16.mxu0 0
      %1643 = vmatmul.mubr.bf16.gmra.mrb[0].mxu0 %v361
      %v1644 = vpop.f32.mrb[0].mxu0
      %v1645 = vadd.f32 %v1588, %v1644
      %v1646 = vpop.f32.mrb[0].mxu0
      %v1647 = vpop.f32.mrb[0].mxu0
      %v1648 = vadd.f32 %v1588, %v1647
      %v1649 = vpop.f32.mrb[0].mxu0
      %1650 = vmatprep.mubr.bf16.mxu0 0
      %1651 = vmatmul.mubr.bf16.gmra.mrb[0].mxu0 %v364
      %v1652 = vpop.f32.mrb[0].mxu0
      %v1653 = vadd.f32 %v1588, %v1652
      %v1654 = vpop.f32.mrb[0].mxu0
      %v1655 = vpop.f32.mrb[0].mxu0
      %v1656 = vadd.f32 %v1588, %v1655
      %v1657 = vpop.f32.mrb[0].mxu0
      %1658 = vmatprep.mubr.bf16.mxu0 0
      %1659 = vmatmul.mubr.bf16.gmra.mrb[0].mxu0 %v367
      %v1660 = vpop.f32.mrb[0].mxu0
      %v1661 = vadd.f32 %v1588, %v1660
      %v1662 = vpop.f32.mrb[0].mxu0
      %v1663 = vpop.f32.mrb[0].mxu0
      %v1664 = vadd.f32 %v1588, %v1663
      %v1665 = vpop.f32.mrb[0].mxu0
      %1666 = vmatprep.mubr.bf16.mxu0 0
      %1667 = vmatmul.mubr.bf16.gmra.mrb[0].mxu0 %v370
      %v1668 = vpop.f32.mrb[0].mxu0
      %v1669 = vadd.f32 %v1588, %v1668
      %v1670 = vpop.f32.mrb[0].mxu0
      %v1671 = vpop.f32.mrb[0].mxu0
      %v1672 = vadd.f32 %v1588, %v1671
      %v1673 = vpop.f32.mrb[0].mxu0
      %1674 = vmatprep.mubr.bf16.mxu0 0
      %1675 = vmatmul.mubr.bf16.gmra.mrb[0].mxu0 %v373
      %v1676 = vpop.f32.mrb[0].mxu0
      %v1677 = vadd.f32 %v1588, %v1676
      %v1678 = vpop.f32.mrb[0].mxu0
      %v1679 = vpop.f32.mrb[0].mxu0
      %v1680 = vadd.f32 %v1588, %v1679
      %v1681 = vpop.f32.mrb[0].mxu0
      %1682 = vmatprep.mubr.bf16.mxu0 0
      %1683 = vmatmul.mubr.bf16.gmra.mrb[0].mxu0 %v376
      %v1684 = vpop.f32.mrb[0].mxu0
      %v1685 = vadd.f32 %v1588, %v1684
      %v1686 = vpop.f32.mrb[0].mxu0
      %v1687 = vpop.f32.mrb[0].mxu0
      %v1688 = vadd.f32 %v1588, %v1687
      %v1689 = vpop.f32.mrb[0].mxu0
      %1690 = vmatprep.mubr.bf16.mxu0 0
      %1691 = vmatmul.mubr.bf16.gmra.mrb[0].mxu0 %v379
      %v1692 = vpop.f32.mrb[0].mxu0
      %v1693 = vadd.f32 %v1588, %v1692
      %v1694 = vpop.f32.mrb[0].mxu0
      %v1695 = vpop.f32.mrb[0].mxu0
      %v1696 = vadd.f32 %v1588, %v1695
      %v1697 = vpop.f32.mrb[0].mxu0
      %1698 = vdwg.mxu0
      %vm1699 = vcmask 31744
      %v1700 = vsel %vm1699, %v1637, -inf
      %1701 = vmax.xlane.f32.xlu0 %v1700
      %v1702 = vpop.xlane.xlu0 %1701
      %v1703 = vsel %vm1699, %v1640, -inf
      %1704 = vmax.xlane.f32.xlu0 %v1703
      %v1705 = vpop.xlane.xlu0 %1704
      %v1706 = vsel %vm1699, %v1645, -inf
      %1707 = vmax.xlane.f32.xlu0 %v1706
      %v1708 = vpop.xlane.xlu0 %1707
      %v1709 = vsel %vm1699, %v1648, -inf
      %1710 = vmax.xlane.f32.xlu0 %v1709
      %v1711 = vpop.xlane.xlu0 %1710
      %v1712 = vsel %vm1699, %v1653, -inf
      %1713 = vmax.xlane.f32.xlu0 %v1712
      %v1714 = vpop.xlane.xlu0 %1713
      %v1715 = vsel %vm1699, %v1656, -inf
      %1716 = vmax.xlane.f32.xlu0 %v1715
      %v1717 = vpop.xlane.xlu0 %1716
      %v1718 = vsel %vm1699, %v1661, -inf
      %1719 = vmax.xlane.f32.xlu0 %v1718
      %v1720 = vpop.xlane.xlu0 %1719
      %v1721 = vsel %vm1699, %v1664, -inf
      %1722 = vmax.xlane.f32.xlu0 %v1721
      %v1723 = vpop.xlane.xlu0 %1722
      %v1724 = vsel %vm1699, %v1669, -inf
      %1725 = vmax.xlane.f32.xlu0 %v1724
      %v1726 = vpop.xlane.xlu0 %1725
      %v1727 = vsel %vm1699, %v1672, -inf
      %1728 = vmax.xlane.f32.xlu0 %v1727
      %v1729 = vpop.xlane.xlu0 %1728
      %v1730 = vsel %vm1699, %v1677, -inf
      %1731 = vmax.xlane.f32.xlu0 %v1730
      %v1732 = vpop.xlane.xlu0 %1731
      %v1733 = vsel %vm1699, %v1680, -inf
      %1734 = vmax.xlane.f32.xlu0 %v1733
      %v1735 = vpop.xlane.xlu0 %1734
      %v1736 = vsel %vm1699, %v1685, -inf
      %1737 = vmax.xlane.f32.xlu0 %v1736
      %v1738 = vpop.xlane.xlu0 %1737
      %v1739 = vsel %vm1699, %v1688, -inf
      %1740 = vmax.xlane.f32.xlu0 %v1739
      %v1741 = vpop.xlane.xlu0 %1740
      %v1742 = vsel %vm1699, %v1693, -inf
      %1743 = vmax.xlane.f32.xlu0 %v1742
      %v1744 = vpop.xlane.xlu0 %1743
      %v1745 = vsel %vm1699, %v1696, -inf
      %1746 = vmax.xlane.f32.xlu0 %v1745
      %v1747 = vpop.xlane.xlu0 %1746
      %v1748 = vsub.f32 %v1637, %v1702
      %v1749 = vsub.f32 %v1640, %v1705
      %v1750 = vsub.f32 %v1645, %v1708
      %v1751 = vsub.f32 %v1648, %v1711
      %v1752 = vsub.f32 %v1653, %v1714
      %v1753 = vsub.f32 %v1656, %v1717
      %v1754 = vsub.f32 %v1661, %v1720
      %v1755 = vsub.f32 %v1664, %v1723
      %v1756 = vsub.f32 %v1669, %v1726
      %v1757 = vsub.f32 %v1672, %v1729
      %v1758 = vsub.f32 %v1677, %v1732
      %v1759 = vsub.f32 %v1680, %v1735
      %v1760 = vsub.f32 %v1685, %v1738
      %v1761 = vsub.f32 %v1688, %v1741
      %v1762 = vsub.f32 %v1693, %v1744
      %v1763 = vsub.f32 %v1696, %v1747
      %v1764 = vmul.f32 %v1748, 1.442695
      %v1765 = vpow.pop %v1764
      %v1766 = vmul.f32 %v1749, 1.442695
      %v1767 = vpow.pop %v1766
      %v1768 = vmul.f32 %v1750, 1.442695
      %v1769 = vpow.pop %v1768
      %v1770 = vmul.f32 %v1751, 1.442695
      %v1771 = vpow.pop %v1770
      %v1772 = vmul.f32 %v1752, 1.442695
      %v1773 = vpow.pop %v1772
      %v1774 = vmul.f32 %v1753, 1.442695
      %v1775 = vpow.pop %v1774
      %v1776 = vmul.f32 %v1754, 1.442695
      %v1777 = vpow.pop %v1776
      %v1778 = vmul.f32 %v1755, 1.442695
      %v1779 = vpow.pop %v1778
      %v1780 = vmul.f32 %v1756, 1.442695
      %v1781 = vpow.pop %v1780
      %v1782 = vmul.f32 %v1757, 1.442695
      %v1783 = vpow.pop %v1782
      %v1784 = vmul.f32 %v1758, 1.442695
      %v1785 = vpow.pop %v1784
      %v1786 = vmul.f32 %v1759, 1.442695
      %v1787 = vpow.pop %v1786
      %v1788 = vmul.f32 %v1760, 1.442695
      %v1789 = vpow.pop %v1788
      %v1790 = vmul.f32 %v1761, 1.442695
      %v1791 = vpow.pop %v1790
      %v1792 = vmul.f32 %v1762, 1.442695
      %v1793 = vpow.pop %v1792
      %v1794 = vmul.f32 %v1763, 1.442695
      %v1795 = vpow.pop %v1794
      %v1796 = vsel %vm1699, %v1765, 0.0
      %1797 = vadd.xlane.f32.xlu0 %v1796
      %v1798 = vpop.xlane.xlu0 %1797
      %v1799 = vsel %vm1699, %v1767, 0.0
      %1800 = vadd.xlane.f32.xlu0 %v1799
      %v1801 = vpop.xlane.xlu0 %1800
      %v1802 = vsel %vm1699, %v1769, 0.0
      %1803 = vadd.xlane.f32.xlu0 %v1802
      %v1804 = vpop.xlane.xlu0 %1803
      %v1805 = vsel %vm1699, %v1771, 0.0
      %1806 = vadd.xlane.f32.xlu0 %v1805
      %v1807 = vpop.xlane.xlu0 %1806
      %v1808 = vsel %vm1699, %v1773, 0.0
      %1809 = vadd.xlane.f32.xlu0 %v1808
      %v1810 = vpop.xlane.xlu0 %1809
      %v1811 = vsel %vm1699, %v1775, 0.0
      %1812 = vadd.xlane.f32.xlu0 %v1811
      %v1813 = vpop.xlane.xlu0 %1812
      %v1814 = vsel %vm1699, %v1777, 0.0
      %1815 = vadd.xlane.f32.xlu0 %v1814
      %v1816 = vpop.xlane.xlu0 %1815
      %v1817 = vsel %vm1699, %v1779, 0.0
      %1818 = vadd.xlane.f32.xlu0 %v1817
      %v1819 = vpop.xlane.xlu0 %1818
      %v1820 = vsel %vm1699, %v1781, 0.0
      %1821 = vadd.xlane.f32.xlu0 %v1820
      %v1822 = vpop.xlane.xlu0 %1821
      %v1823 = vsel %vm1699, %v1783, 0.0
      %1824 = vadd.xlane.f32.xlu0 %v1823
      %v1825 = vpop.xlane.xlu0 %1824
      %v1826 = vsel %vm1699, %v1785, 0.0
      %1827 = vadd.xlane.f32.xlu0 %v1826
      %v1828 = vpop.xlane.xlu0 %1827
      %v1829 = vsel %vm1699, %v1787, 0.0
      %1830 = vadd.xlane.f32.xlu0 %v1829
      %v1831 = vpop.xlane.xlu0 %1830
      %v1832 = vsel %vm1699, %v1789, 0.0
      %1833 = vadd.xlane.f32.xlu0 %v1832
      %v1834 = vpop.xlane.xlu0 %1833
      %v1835 = vsel %vm1699, %v1791, 0.0
      %1836 = vadd.xlane.f32.xlu0 %v1835
      %v1837 = vpop.xlane.xlu0 %1836
      %v1838 = vsel %vm1699, %v1793, 0.0
      %1839 = vadd.xlane.f32.xlu0 %v1838
      %v1840 = vpop.xlane.xlu0 %1839
      %v1841 = vsel %vm1699, %v1795, 0.0
      %1842 = vadd.xlane.f32.xlu0 %v1841
      %v1843 = vpop.xlane.xlu0 %1842
      %v1844 = vrcp.pop %v1798
      %v1845 = vmul.f32 %v1765, %v1844
      %v1846 = vrcp.pop %v1801
      %v1847 = vmul.f32 %v1767, %v1846
      %v1848 = vrcp.pop %v1804
      %v1849 = vmul.f32 %v1769, %v1848
      %v1850 = vrcp.pop %v1807
      %v1851 = vmul.f32 %v1771, %v1850
      %v1852 = vrcp.pop %v1810
      %v1853 = vmul.f32 %v1773, %v1852
      %v1854 = vrcp.pop %v1813
      %v1855 = vmul.f32 %v1775, %v1854
      %v1856 = vrcp.pop %v1816
      %v1857 = vmul.f32 %v1777, %v1856
      %v1858 = vrcp.pop %v1819
      %v1859 = vmul.f32 %v1779, %v1858
      %v1860 = vrcp.pop %v1822
      %v1861 = vmul.f32 %v1781, %v1860
      %v1862 = vrcp.pop %v1825
      %v1863 = vmul.f32 %v1783, %v1862
      %v1864 = vrcp.pop %v1828
      %v1865 = vmul.f32 %v1785, %v1864
      %v1866 = vrcp.pop %v1831
      %v1867 = vmul.f32 %v1787, %v1866
      %v1868 = vrcp.pop %v1834
      %v1869 = vmul.f32 %v1789, %v1868
      %v1870 = vrcp.pop %v1837
      %v1871 = vmul.f32 %v1791, %v1870
      %v1872 = vrcp.pop %v1840
      %v1873 = vmul.f32 %v1793, %v1872
      %v1874 = vrcp.pop %v1843
      %v1875 = vmul.f32 %v1795, %v1874
      %v1876 = vsel %vm1699, %v1845, 0.0
      %1877 = vadd.xlane.f32.xlu0 %v1876
      %v1878 = vpop.xlane.xlu0 %1877
      %v1879 = vsel %vm1699, %v1847, 0.0
      %1880 = vadd.xlane.f32.xlu0 %v1879
      %v1881 = vpop.xlane.xlu0 %1880
      %v1882 = vsel %vm1699, %v1849, 0.0
      %1883 = vadd.xlane.f32.xlu0 %v1882
      %v1884 = vpop.xlane.xlu0 %1883
      %v1885 = vsel %vm1699, %v1851, 0.0
      %1886 = vadd.xlane.f32.xlu0 %v1885
      %v1887 = vpop.xlane.xlu0 %1886
      %v1888 = vsel %vm1699, %v1853, 0.0
      %1889 = vadd.xlane.f32.xlu0 %v1888
      %v1890 = vpop.xlane.xlu0 %1889
      %v1891 = vsel %vm1699, %v1855, 0.0
      %1892 = vadd.xlane.f32.xlu0 %v1891
      %v1893 = vpop.xlane.xlu0 %1892
      %v1894 = vsel %vm1699, %v1857, 0.0
      %1895 = vadd.xlane.f32.xlu0 %v1894
      %v1896 = vpop.xlane.xlu0 %1895
      %v1897 = vsel %vm1699, %v1859, 0.0
      %1898 = vadd.xlane.f32.xlu0 %v1897
      %v1899 = vpop.xlane.xlu0 %1898
      %v1900 = vsel %vm1699, %v1861, 0.0
      %1901 = vadd.xlane.f32.xlu0 %v1900
      %v1902 = vpop.xlane.xlu0 %1901
      %v1903 = vsel %vm1699, %v1863, 0.0
      %1904 = vadd.xlane.f32.xlu0 %v1903
      %v1905 = vpop.xlane.xlu0 %1904
      %v1906 = vsel %vm1699, %v1865, 0.0
      %1907 = vadd.xlane.f32.xlu0 %v1906
      %v1908 = vpop.xlane.xlu0 %1907
      %v1909 = vsel %vm1699, %v1867, 0.0
      %1910 = vadd.xlane.f32.xlu0 %v1909
      %v1911 = vpop.xlane.xlu0 %1910
      %v1912 = vsel %vm1699, %v1869, 0.0
      %1913 = vadd.xlane.f32.xlu0 %v1912
      %v1914 = vpop.xlane.xlu0 %1913
      %v1915 = vsel %vm1699, %v1871, 0.0
      %1916 = vadd.xlane.f32.xlu0 %v1915
      %v1917 = vpop.xlane.xlu0 %1916
      %v1918 = vsel %vm1699, %v1873, 0.0
      %1919 = vadd.xlane.f32.xlu0 %v1918
      %v1920 = vpop.xlane.xlu0 %1919
      %v1921 = vsel %vm1699, %v1875, 0.0
      %1922 = vadd.xlane.f32.xlu0 %v1921
      %v1923 = vpop.xlane.xlu0 %1922
      %v1924 = vmul.f32 %v1564, %v1878
      %v1925 = vmul.f32 %v1565, %v1881
      %v1926 = vmul.f32 %v1566, %v1884
      %v1927 = vmul.f32 %v1567, %v1887
      %v1928 = vmul.f32 %v1568, %v1890
      %v1929 = vmul.f32 %v1569, %v1893
      %v1930 = vmul.f32 %v1570, %v1896
      %v1931 = vmul.f32 %v1571, %v1899
      %v1932 = vmul.f32 %v1572, %v1902
      %v1933 = vmul.f32 %v1573, %v1905
      %v1934 = vmul.f32 %v1574, %v1908
      %v1935 = vmul.f32 %v1575, %v1911
      %v1936 = vmul.f32 %v1576, %v1914
      %v1937 = vmul.f32 %v1577, %v1917
      %v1938 = vmul.f32 %v1578, %v1920
      %v1939 = vmul.f32 %v1579, %v1923
      %v1940 = vld [vmem:[%s6] sm:$0x7]
      %v1941 = vpack.c.bf16 %v1925, %v1924
      %v1942 = vpack.c.bf16 %v1927, %v1926
      %v1943 = vpack.c.bf16 %v1929, %v1928
      %v1944 = vpack.c.bf16 %v1931, %v1930
      %v1945 = vpack.c.bf16 %v1933, %v1932
      %v1946 = vpack.c.bf16 %v1935, %v1934
      %v1947 = vpack.c.bf16 %v1937, %v1936
      %v1948 = vpack.c.bf16 %v1939, %v1938
      %v1949 = vld [vmem:[%s5] sm:$0xf]
      %v1950 = vld [vmem:[%s5 + $0x4] sm:$0xf]
      %v1951 = vld [vmem:[%s5 + $0x8] sm:$0xf]
      %v1952 = vld [vmem:[%s5 + $0xc] sm:$0xf]
      %v1953 = vlaneseq
      %v1954 = vshrl.u32 %v1953, 7
      %v1955 = vsub.s32 0, %v1954
      %v1956 = vrot.slane %v1940, %v1955
      %v1961 = vunpack.c.l.b16 %v1949
      %v1962 = vunpack.c.l.b16 %v1950
      %v1963 = vunpack.c.l.b16 %v1951
      %v1964 = vunpack.c.l.b16 %v1952
      %v1965 = vpack.c.b16 %v1962, %v1961
      %v1966 = vpack.c.b16 %v1964, %v1963
      %v1970 = vsel %vm482, %v1941, 0
      %v1973 = vsel %vm482, %v1942, 0
      %v1976 = vsel %vm482, %v1943, 0
      %v1979 = vsel %vm482, %v1944, 0
      %v1982 = vsel %vm482, %v1945, 0
      %v1985 = vsel %vm482, %v1946, 0
      %v1988 = vsel %vm482, %v1947, 0
      %v1991 = vsel %vm482, %v1948, 0
      %1993 = vmatprep.subr.bf16.mxu0 0
      %1994 = vmatpush1.bf16.msra.mxu0 %v1965
      %1995 = vmatprep.subr.bf16.mxu0 0
      %1996 = vmatpush1.bf16.msra.mxu0 %v1966
      %1997 = vmatprep.subr.bf16.mxu0 0
      %1998 = vmatpush1.bf16.msra.mxu0 0
      %1999 = vmatprep.subr.bf16.mxu0 0
      %2000 = vmatpush1.bf16.msra.mxu0 0
      %2001 = vmatprep.subr.bf16.mxu0 0
      %2002 = vmatpush1.bf16.msra.mxu0 0
      %2003 = vmatprep.subr.bf16.mxu0 0
      %2004 = vmatpush1.bf16.msra.mxu0 0
      %2005 = vmatprep.subr.bf16.mxu0 0
      %2006 = vmatpush1.bf16.msra.mxu0 0
      %2007 = vmatprep.subr.bf16.mxu0 0
      %2008 = vmatpush1.bf16.msra.mxu0 0
      %2009 = vmatprep.subr.bf16.mxu0 0
      %2010 = vmatpush1.bf16.msra.mxu0 0
      %2011 = vmatprep.subr.bf16.mxu0 0
      %2012 = vmatpush1.bf16.msra.mxu0 0
      %2013 = vmatprep.subr.bf16.mxu0 0
      %2014 = vmatpush1.bf16.msra.mxu0 0
      %2015 = vmatprep.subr.bf16.mxu0 0
      %2016 = vmatpush1.bf16.msra.mxu0 0
      %2017 = vmatprep.subr.bf16.mxu0 0
      %2018 = vmatpush1.bf16.msra.mxu0 0
      %2019 = vmatprep.subr.bf16.mxu0 0
      %2020 = vmatpush1.bf16.msra.mxu0 0
      %2021 = vmatprep.subr.bf16.mxu0 0
      %2022 = vmatpush1.bf16.msra.mxu0 0
      %2023 = vmatprep.subr.bf16.mxu0 0
      %2024 = vmatpush1.bf16.msra.mxu0 0
      %2025 = vmatprep.mubr.bf16.mxu0 0
      %2026 = vmatmul.mubr.bf16.gmra.mrb[0].mxu0 %v1970
      %v2027 = vpop.f32.mrb[0].mxu0
      %v2028 = vadd.f32 %v1956, %v2027
      %v2029 = vpop.f32.mrb[0].mxu0
      %v2030 = vpop.f32.mrb[0].mxu0
      %v2031 = vadd.f32 %v1956, %v2030
      %v2032 = vpop.f32.mrb[0].mxu0
      %2033 = vmatprep.mubr.bf16.mxu0 0
      %2034 = vmatmul.mubr.bf16.gmra.mrb[0].mxu0 %v1973
      %v2035 = vpop.f32.mrb[0].mxu0
      %v2036 = vadd.f32 %v1956, %v2035
      %v2037 = vpop.f32.mrb[0].mxu0
      %v2038 = vpop.f32.mrb[0].mxu0
      %v2039 = vadd.f32 %v1956, %v2038
      %v2040 = vpop.f32.mrb[0].mxu0
      %2041 = vmatprep.mubr.bf16.mxu0 0
      %2042 = vmatmul.mubr.bf16.gmra.mrb[0].mxu0 %v1976
      %v2043 = vpop.f32.mrb[0].mxu0
      %v2044 = vadd.f32 %v1956, %v2043
      %v2045 = vpop.f32.mrb[0].mxu0
      %v2046 = vpop.f32.mrb[0].mxu0
      %v2047 = vadd.f32 %v1956, %v2046
      %v2048 = vpop.f32.mrb[0].mxu0
      %2049 = vmatprep.mubr.bf16.mxu0 0
      %2050 = vmatmul.mubr.bf16.gmra.mrb[0].mxu0 %v1979
      %v2051 = vpop.f32.mrb[0].mxu0
      %v2052 = vadd.f32 %v1956, %v2051
      %v2053 = vpop.f32.mrb[0].mxu0
      %v2054 = vpop.f32.mrb[0].mxu0
      %v2055 = vadd.f32 %v1956, %v2054
      %v2056 = vpop.f32.mrb[0].mxu0
      %2057 = vmatprep.mubr.bf16.mxu0 0
      %2058 = vmatmul.mubr.bf16.gmra.mrb[0].mxu0 %v1982
      %v2059 = vpop.f32.mrb[0].mxu0
      %v2060 = vadd.f32 %v1956, %v2059
      %v2061 = vpop.f32.mrb[0].mxu0
      %v2062 = vpop.f32.mrb[0].mxu0
      %v2063 = vadd.f32 %v1956, %v2062
      %v2064 = vpop.f32.mrb[0].mxu0
      %2065 = vmatprep.mubr.bf16.mxu0 0
      %2066 = vmatmul.mubr.bf16.gmra.mrb[0].mxu0 %v1985
      %v2067 = vpop.f32.mrb[0].mxu0
      %v2068 = vadd.f32 %v1956, %v2067
      %v2069 = vpop.f32.mrb[0].mxu0
      %v2070 = vpop.f32.mrb[0].mxu0
      %v2071 = vadd.f32 %v1956, %v2070
      %v2072 = vpop.f32.mrb[0].mxu0
      %2073 = vmatprep.mubr.bf16.mxu0 0
      %2074 = vmatmul.mubr.bf16.gmra.mrb[0].mxu0 %v1988
      %v2075 = vpop.f32.mrb[0].mxu0
      %v2076 = vadd.f32 %v1956, %v2075
      %v2077 = vpop.f32.mrb[0].mxu0
      %v2078 = vpop.f32.mrb[0].mxu0
      %v2079 = vadd.f32 %v1956, %v2078
      %v2080 = vpop.f32.mrb[0].mxu0
      %2081 = vmatprep.mubr.bf16.mxu0 0
      %2082 = vmatmul.mubr.bf16.gmra.mrb[0].mxu0 %v1991
      %v2083 = vpop.f32.mrb[0].mxu0
      %v2084 = vadd.f32 %v1956, %v2083
      %v2085 = vpop.f32.mrb[0].mxu0
      %v2086 = vpop.f32.mrb[0].mxu0
      %v2087 = vadd.f32 %v1956, %v2086
      %v2088 = vpop.f32.mrb[0].mxu0
      %2089 = vdwg.mxu0
      %vm2090 = vcmask 130048
      %v2091 = vsel %vm2090, %v2028, 0.0
      %2092 = vadd.xlane.f32.xlu0 %v2091
      %v2093 = vpop.xlane.xlu0 %2092
      %v2094 = vsel %vm2090, %v2031, 0.0
      %2095 = vadd.xlane.f32.xlu0 %v2094
      %v2096 = vpop.xlane.xlu0 %2095
      %v2097 = vsel %vm2090, %v2036, 0.0
      %2098 = vadd.xlane.f32.xlu0 %v2097
      %v2099 = vpop.xlane.xlu0 %2098
      %v2100 = vsel %vm2090, %v2039, 0.0
      %2101 = vadd.xlane.f32.xlu0 %v2100
      %v2102 = vpop.xlane.xlu0 %2101
      %v2103 = vsel %vm2090, %v2044, 0.0
      %2104 = vadd.xlane.f32.xlu0 %v2103
      %v2105 = vpop.xlane.xlu0 %2104
      %v2106 = vsel %vm2090, %v2047, 0.0
      %2107 = vadd.xlane.f32.xlu0 %v2106
      %v2108 = vpop.xlane.xlu0 %2107
      %v2109 = vsel %vm2090, %v2052, 0.0
      %2110 = vadd.xlane.f32.xlu0 %v2109
      %v2111 = vpop.xlane.xlu0 %2110
      %v2112 = vsel %vm2090, %v2055, 0.0
      %2113 = vadd.xlane.f32.xlu0 %v2112
      %v2114 = vpop.xlane.xlu0 %2113
      %v2115 = vsel %vm2090, %v2060, 0.0
      %2116 = vadd.xlane.f32.xlu0 %v2115
      %v2117 = vpop.xlane.xlu0 %2116
      %v2118 = vsel %vm2090, %v2063, 0.0
      %2119 = vadd.xlane.f32.xlu0 %v2118
      %v2120 = vpop.xlane.xlu0 %2119
      %v2121 = vsel %vm2090, %v2068, 0.0
      %2122 = vadd.xlane.f32.xlu0 %v2121
      %v2123 = vpop.xlane.xlu0 %2122
      %v2124 = vsel %vm2090, %v2071, 0.0
      %2125 = vadd.xlane.f32.xlu0 %v2124
      %v2126 = vpop.xlane.xlu0 %2125
      %v2127 = vsel %vm2090, %v2076, 0.0
      %2128 = vadd.xlane.f32.xlu0 %v2127
      %v2129 = vpop.xlane.xlu0 %2128
      %v2130 = vsel %vm2090, %v2079, 0.0
      %2131 = vadd.xlane.f32.xlu0 %v2130
      %v2132 = vpop.xlane.xlu0 %2131
      %v2133 = vsel %vm2090, %v2084, 0.0
      %2134 = vadd.xlane.f32.xlu0 %v2133
      %v2135 = vpop.xlane.xlu0 %2134
      %v2136 = vsel %vm2090, %v2087, 0.0
      %2137 = vadd.xlane.f32.xlu0 %v2136
      %v2138 = vpop.xlane.xlu0 %2137
      %v2139 = vrcp.pop 16.0
      %v2140 = vmul.f32 %v2093, %v2139
      %v2141 = vmul.f32 %v2096, %v2139
      %v2142 = vmul.f32 %v2099, %v2139
      %v2143 = vmul.f32 %v2102, %v2139
      %v2144 = vmul.f32 %v2105, %v2139
      %v2145 = vmul.f32 %v2108, %v2139
      %v2146 = vmul.f32 %v2111, %v2139
      %v2147 = vmul.f32 %v2114, %v2139
      %v2148 = vmul.f32 %v2117, %v2139
      %v2149 = vmul.f32 %v2120, %v2139
      %v2150 = vmul.f32 %v2123, %v2139
      %v2151 = vmul.f32 %v2126, %v2139
      %v2152 = vmul.f32 %v2129, %v2139
      %v2153 = vmul.f32 %v2132, %v2139
      %v2154 = vmul.f32 %v2135, %v2139
      %v2155 = vmul.f32 %v2138, %v2139
      %v2156 = vmul.f32 %v2028, %v2028
      %v2157 = vmul.f32 %v2031, %v2031
      %v2158 = vmul.f32 %v2036, %v2036
      %v2159 = vmul.f32 %v2039, %v2039
      %v2160 = vmul.f32 %v2044, %v2044
      %v2161 = vmul.f32 %v2047, %v2047
      %v2162 = vmul.f32 %v2052, %v2052
      %v2163 = vmul.f32 %v2055, %v2055
      %v2164 = vmul.f32 %v2060, %v2060
      %v2165 = vmul.f32 %v2063, %v2063
      %v2166 = vmul.f32 %v2068, %v2068
      %v2167 = vmul.f32 %v2071, %v2071
      %v2168 = vmul.f32 %v2076, %v2076
      %v2169 = vmul.f32 %v2079, %v2079
      %v2170 = vmul.f32 %v2084, %v2084
      %v2171 = vmul.f32 %v2087, %v2087
      %v2172 = vsel %vm2090, %v2156, 0.0
      %2173 = vadd.xlane.f32.xlu0 %v2172
      %v2174 = vpop.xlane.xlu0 %2173
      %v2175 = vsel %vm2090, %v2157, 0.0
      %2176 = vadd.xlane.f32.xlu0 %v2175
      %v2177 = vpop.xlane.xlu0 %2176
      %v2178 = vsel %vm2090, %v2158, 0.0
      %2179 = vadd.xlane.f32.xlu0 %v2178
      %v2180 = vpop.xlane.xlu0 %2179
      %v2181 = vsel %vm2090, %v2159, 0.0
      %2182 = vadd.xlane.f32.xlu0 %v2181
      %v2183 = vpop.xlane.xlu0 %2182
      %v2184 = vsel %vm2090, %v2160, 0.0
      %2185 = vadd.xlane.f32.xlu0 %v2184
      %v2186 = vpop.xlane.xlu0 %2185
      %v2187 = vsel %vm2090, %v2161, 0.0
      %2188 = vadd.xlane.f32.xlu0 %v2187
      %v2189 = vpop.xlane.xlu0 %2188
      %v2190 = vsel %vm2090, %v2162, 0.0
      %2191 = vadd.xlane.f32.xlu0 %v2190
      %v2192 = vpop.xlane.xlu0 %2191
      %v2193 = vsel %vm2090, %v2163, 0.0
      %2194 = vadd.xlane.f32.xlu0 %v2193
      %v2195 = vpop.xlane.xlu0 %2194
      %v2196 = vsel %vm2090, %v2164, 0.0
      %2197 = vadd.xlane.f32.xlu0 %v2196
      %v2198 = vpop.xlane.xlu0 %2197
      %v2199 = vsel %vm2090, %v2165, 0.0
      %2200 = vadd.xlane.f32.xlu0 %v2199
      %v2201 = vpop.xlane.xlu0 %2200
      %v2202 = vsel %vm2090, %v2166, 0.0
      %2203 = vadd.xlane.f32.xlu0 %v2202
      %v2204 = vpop.xlane.xlu0 %2203
      %v2205 = vsel %vm2090, %v2167, 0.0
      %2206 = vadd.xlane.f32.xlu0 %v2205
      %v2207 = vpop.xlane.xlu0 %2206
      %v2208 = vsel %vm2090, %v2168, 0.0
      %2209 = vadd.xlane.f32.xlu0 %v2208
      %v2210 = vpop.xlane.xlu0 %2209
      %v2211 = vsel %vm2090, %v2169, 0.0
      %2212 = vadd.xlane.f32.xlu0 %v2211
      %v2213 = vpop.xlane.xlu0 %2212
      %v2214 = vsel %vm2090, %v2170, 0.0
      %2215 = vadd.xlane.f32.xlu0 %v2214
      %v2216 = vpop.xlane.xlu0 %2215
      %v2217 = vsel %vm2090, %v2171, 0.0
      %2218 = vadd.xlane.f32.xlu0 %v2217
      %v2219 = vpop.xlane.xlu0 %2218
      %v2220 = vmul.f32 %v2174, %v2139
      %v2221 = vmul.f32 %v2177, %v2139
      %v2222 = vmul.f32 %v2180, %v2139
      %v2223 = vmul.f32 %v2183, %v2139
      %v2224 = vmul.f32 %v2186, %v2139
      %v2225 = vmul.f32 %v2189, %v2139
      %v2226 = vmul.f32 %v2192, %v2139
      %v2227 = vmul.f32 %v2195, %v2139
      %v2228 = vmul.f32 %v2198, %v2139
      %v2229 = vmul.f32 %v2201, %v2139
      %v2230 = vmul.f32 %v2204, %v2139
      %v2231 = vmul.f32 %v2207, %v2139
      %v2232 = vmul.f32 %v2210, %v2139
      %v2233 = vmul.f32 %v2213, %v2139
      %v2234 = vmul.f32 %v2216, %v2139
      %v2235 = vmul.f32 %v2219, %v2139
      %v2236 = vmul.f32 %v2140, %v2140
      %v2237 = vmul.f32 %v2141, %v2141
      %v2238 = vmul.f32 %v2142, %v2142
      %v2239 = vmul.f32 %v2143, %v2143
      %v2240 = vmul.f32 %v2144, %v2144
      %v2241 = vmul.f32 %v2145, %v2145
      %v2242 = vmul.f32 %v2146, %v2146
      %v2243 = vmul.f32 %v2147, %v2147
      %v2244 = vmul.f32 %v2148, %v2148
      %v2245 = vmul.f32 %v2149, %v2149
      %v2246 = vmul.f32 %v2150, %v2150
      %v2247 = vmul.f32 %v2151, %v2151
      %v2248 = vmul.f32 %v2152, %v2152
      %v2249 = vmul.f32 %v2153, %v2153
      %v2250 = vmul.f32 %v2154, %v2154
      %v2251 = vmul.f32 %v2155, %v2155
      %v2252 = vsub.f32 %v2220, %v2236
      %v2253 = vsub.f32 %v2221, %v2237
      %v2254 = vsub.f32 %v2222, %v2238
      %v2255 = vsub.f32 %v2223, %v2239
      %v2256 = vsub.f32 %v2224, %v2240
      %v2257 = vsub.f32 %v2225, %v2241
      %v2258 = vsub.f32 %v2226, %v2242
      %v2259 = vsub.f32 %v2227, %v2243
      %v2260 = vsub.f32 %v2228, %v2244
      %v2261 = vsub.f32 %v2229, %v2245
      %v2262 = vsub.f32 %v2230, %v2246
      %v2263 = vsub.f32 %v2231, %v2247
      %v2264 = vsub.f32 %v2232, %v2248
      %v2265 = vsub.f32 %v2233, %v2249
      %v2266 = vsub.f32 %v2234, %v2250
      %v2267 = vsub.f32 %v2235, %v2251
      %v2268 = vmax.f32 %v2252, 0.0
      %v2269 = vmax.f32 %v2253, 0.0
      %v2270 = vmax.f32 %v2254, 0.0
      %v2271 = vmax.f32 %v2255, 0.0
      %v2272 = vmax.f32 %v2256, 0.0
      %v2273 = vmax.f32 %v2257, 0.0
      %v2274 = vmax.f32 %v2258, 0.0
      %v2275 = vmax.f32 %v2259, 0.0
      %v2276 = vmax.f32 %v2260, 0.0
      %v2277 = vmax.f32 %v2261, 0.0
      %v2278 = vmax.f32 %v2262, 0.0
      %v2279 = vmax.f32 %v2263, 0.0
      %v2280 = vmax.f32 %v2264, 0.0
      %v2281 = vmax.f32 %v2265, 0.0
      %v2282 = vmax.f32 %v2266, 0.0
      %v2283 = vmax.f32 %v2267, 0.0
      %v2284 = vsub.f32 %v2028, %v2140
      %v2285 = vsub.f32 %v2031, %v2141
      %v2286 = vsub.f32 %v2036, %v2142
      %v2287 = vsub.f32 %v2039, %v2143
      %v2288 = vsub.f32 %v2044, %v2144
      %v2289 = vsub.f32 %v2047, %v2145
      %v2290 = vsub.f32 %v2052, %v2146
      %v2291 = vsub.f32 %v2055, %v2147
      %v2292 = vsub.f32 %v2060, %v2148
      %v2293 = vsub.f32 %v2063, %v2149
      %v2294 = vsub.f32 %v2068, %v2150
      %v2295 = vsub.f32 %v2071, %v2151
      %v2296 = vsub.f32 %v2076, %v2152
      %v2297 = vsub.f32 %v2079, %v2153
      %v2298 = vsub.f32 %v2084, %v2154
      %v2299 = vsub.f32 %v2087, %v2155
      %v2300 = vadd.f32 %v2268, 1e-05
      %v2301 = vadd.f32 %v2269, 1e-05
      %v2302 = vadd.f32 %v2270, 1e-05
      %v2303 = vadd.f32 %v2271, 1e-05
      %v2304 = vadd.f32 %v2272, 1e-05
      %v2305 = vadd.f32 %v2273, 1e-05
      %v2306 = vadd.f32 %v2274, 1e-05
      %v2307 = vadd.f32 %v2275, 1e-05
      %v2308 = vadd.f32 %v2276, 1e-05
      %v2309 = vadd.f32 %v2277, 1e-05
      %v2310 = vadd.f32 %v2278, 1e-05
      %v2311 = vadd.f32 %v2279, 1e-05
      %v2312 = vadd.f32 %v2280, 1e-05
      %v2313 = vadd.f32 %v2281, 1e-05
      %v2314 = vadd.f32 %v2282, 1e-05
      %v2315 = vadd.f32 %v2283, 1e-05
      %v2316 = vrsqrt.pop %v2300
      %v2317 = vrsqrt.pop %v2301
      %v2318 = vrsqrt.pop %v2302
      %v2319 = vrsqrt.pop %v2303
      %v2320 = vrsqrt.pop %v2304
      %v2321 = vrsqrt.pop %v2305
      %v2322 = vrsqrt.pop %v2306
      %v2323 = vrsqrt.pop %v2307
      %v2324 = vrsqrt.pop %v2308
      %v2325 = vrsqrt.pop %v2309
      %v2326 = vrsqrt.pop %v2310
      %v2327 = vrsqrt.pop %v2311
      %v2328 = vrsqrt.pop %v2312
      %v2329 = vrsqrt.pop %v2313
      %v2330 = vrsqrt.pop %v2314
      %v2331 = vrsqrt.pop %v2315
      %v2332 = vmul.f32 %v2284, %v2316
      %v2333 = vmul.f32 %v2285, %v2317
      %v2334 = vmul.f32 %v2286, %v2318
      %v2335 = vmul.f32 %v2287, %v2319
      %v2336 = vmul.f32 %v2288, %v2320
      %v2337 = vmul.f32 %v2289, %v2321
      %v2338 = vmul.f32 %v2290, %v2322
      %v2339 = vmul.f32 %v2291, %v2323
      %v2340 = vmul.f32 %v2292, %v2324
      %v2341 = vmul.f32 %v2293, %v2325
      %v2342 = vmul.f32 %v2294, %v2326
      %v2343 = vmul.f32 %v2295, %v2327
      %v2344 = vmul.f32 %v2296, %v2328
      %v2345 = vmul.f32 %v2297, %v2329
      %v2346 = vmul.f32 %v2298, %v2330
      %v2347 = vmul.f32 %v2299, %v2331
      %v2348 = vlaneseq
      %v2349 = vshrl.u32 %v2348, 7
      %v2350 = vsub.s32 1, %v2349
      %v2351 = vrot.slane %v1940, %v2350
      %v2352 = vmul.f32 %v2332, %v2351
      %v2353 = vmul.f32 %v2333, %v2351
      %v2354 = vmul.f32 %v2334, %v2351
      %v2355 = vmul.f32 %v2335, %v2351
      %v2356 = vmul.f32 %v2336, %v2351
      %v2357 = vmul.f32 %v2337, %v2351
      %v2358 = vmul.f32 %v2338, %v2351
      %v2359 = vmul.f32 %v2339, %v2351
      %v2360 = vmul.f32 %v2340, %v2351
      %v2361 = vmul.f32 %v2341, %v2351
      %v2362 = vmul.f32 %v2342, %v2351
      %v2363 = vmul.f32 %v2343, %v2351
      %v2364 = vmul.f32 %v2344, %v2351
      %v2365 = vmul.f32 %v2345, %v2351
      %v2366 = vmul.f32 %v2346, %v2351
      %v2367 = vmul.f32 %v2347, %v2351
      %v2368 = vlaneseq
      %v2369 = vshrl.u32 %v2368, 7
      %v2370 = vsub.s32 2, %v2369
      %v2371 = vrot.slane %v1940, %v2370
      %v2372 = vadd.f32 %v2352, %v2371
      %v2373 = vadd.f32 %v2353, %v2371
      %v2374 = vadd.f32 %v2354, %v2371
      %v2375 = vadd.f32 %v2355, %v2371
      %v2376 = vadd.f32 %v2356, %v2371
      %v2377 = vadd.f32 %v2357, %v2371
      %v2378 = vadd.f32 %v2358, %v2371
      %v2379 = vadd.f32 %v2359, %v2371
      %v2380 = vadd.f32 %v2360, %v2371
      %v2381 = vadd.f32 %v2361, %v2371
      %v2382 = vadd.f32 %v2362, %v2371
      %v2383 = vadd.f32 %v2363, %v2371
      %v2384 = vadd.f32 %v2364, %v2371
      %v2385 = vadd.f32 %v2365, %v2371
      %v2386 = vadd.f32 %v2366, %v2371
      %v2387 = vadd.f32 %v2367, %v2371
      %v2388 = vmin.f32 %v2372, 20.0
      %v2389 = vmin.f32 %v2373, 20.0
      %v2390 = vmin.f32 %v2374, 20.0
      %v2391 = vmin.f32 %v2375, 20.0
      %v2392 = vmin.f32 %v2376, 20.0
      %v2393 = vmin.f32 %v2377, 20.0
      %v2394 = vmin.f32 %v2378, 20.0
      %v2395 = vmin.f32 %v2379, 20.0
      %v2396 = vmin.f32 %v2380, 20.0
      %v2397 = vmin.f32 %v2381, 20.0
      %v2398 = vmin.f32 %v2382, 20.0
      %v2399 = vmin.f32 %v2383, 20.0
      %v2400 = vmin.f32 %v2384, 20.0
      %v2401 = vmin.f32 %v2385, 20.0
      %v2402 = vmin.f32 %v2386, 20.0
      %v2403 = vmin.f32 %v2387, 20.0
      %v2404 = vmul.f32 %v2388, 1.442695
      %v2405 = vpow.pop %v2404
      %v2406 = vmul.f32 %v2389, 1.442695
      %v2407 = vpow.pop %v2406
      %v2408 = vmul.f32 %v2390, 1.442695
      %v2409 = vpow.pop %v2408
      %v2410 = vmul.f32 %v2391, 1.442695
      %v2411 = vpow.pop %v2410
      %v2412 = vmul.f32 %v2392, 1.442695
      %v2413 = vpow.pop %v2412
      %v2414 = vmul.f32 %v2393, 1.442695
      %v2415 = vpow.pop %v2414
      %v2416 = vmul.f32 %v2394, 1.442695
      %v2417 = vpow.pop %v2416
      %v2418 = vmul.f32 %v2395, 1.442695
      %v2419 = vpow.pop %v2418
      %v2420 = vmul.f32 %v2396, 1.442695
      %v2421 = vpow.pop %v2420
      %v2422 = vmul.f32 %v2397, 1.442695
      %v2423 = vpow.pop %v2422
      %v2424 = vmul.f32 %v2398, 1.442695
      %v2425 = vpow.pop %v2424
      %v2426 = vmul.f32 %v2399, 1.442695
      %v2427 = vpow.pop %v2426
      %v2428 = vmul.f32 %v2400, 1.442695
      %v2429 = vpow.pop %v2428
      %v2430 = vmul.f32 %v2401, 1.442695
      %v2431 = vpow.pop %v2430
      %v2432 = vmul.f32 %v2402, 1.442695
      %v2433 = vpow.pop %v2432
      %v2434 = vmul.f32 %v2403, 1.442695
      %v2435 = vpow.pop %v2434
      %v2436 = vadd.f32 %v2405, 2.0
      %v2437 = vadd.f32 %v2407, 2.0
      %v2438 = vadd.f32 %v2409, 2.0
      %v2439 = vadd.f32 %v2411, 2.0
      %v2440 = vadd.f32 %v2413, 2.0
      %v2441 = vadd.f32 %v2415, 2.0
      %v2442 = vadd.f32 %v2417, 2.0
      %v2443 = vadd.f32 %v2419, 2.0
      %v2444 = vadd.f32 %v2421, 2.0
      %v2445 = vadd.f32 %v2423, 2.0
      %v2446 = vadd.f32 %v2425, 2.0
      %v2447 = vadd.f32 %v2427, 2.0
      %v2448 = vadd.f32 %v2429, 2.0
      %v2449 = vadd.f32 %v2431, 2.0
      %v2450 = vadd.f32 %v2433, 2.0
      %v2451 = vadd.f32 %v2435, 2.0
      %v2452 = vmul.f32 %v2405, %v2436
      %v2453 = vmul.f32 %v2407, %v2437
      %v2454 = vmul.f32 %v2409, %v2438
      %v2455 = vmul.f32 %v2411, %v2439
      %v2456 = vmul.f32 %v2413, %v2440
      %v2457 = vmul.f32 %v2415, %v2441
      %v2458 = vmul.f32 %v2417, %v2442
      %v2459 = vmul.f32 %v2419, %v2443
      %v2460 = vmul.f32 %v2421, %v2444
      %v2461 = vmul.f32 %v2423, %v2445
      %v2462 = vmul.f32 %v2425, %v2446
      %v2463 = vmul.f32 %v2427, %v2447
      %v2464 = vmul.f32 %v2429, %v2448
      %v2465 = vmul.f32 %v2431, %v2449
      %v2466 = vmul.f32 %v2433, %v2450
      %v2467 = vmul.f32 %v2435, %v2451
      %vm2468 = vcmp.gt.f32.partialorder %v2372, 20.0
      %vm2469 = vcmp.gt.f32.partialorder %v2373, 20.0
      %vm2470 = vcmp.gt.f32.partialorder %v2374, 20.0
      %vm2471 = vcmp.gt.f32.partialorder %v2375, 20.0
      %vm2472 = vcmp.gt.f32.partialorder %v2376, 20.0
      %vm2473 = vcmp.gt.f32.partialorder %v2377, 20.0
      %vm2474 = vcmp.gt.f32.partialorder %v2378, 20.0
      %vm2475 = vcmp.gt.f32.partialorder %v2379, 20.0
      %vm2476 = vcmp.gt.f32.partialorder %v2380, 20.0
      %vm2477 = vcmp.gt.f32.partialorder %v2381, 20.0
      %vm2478 = vcmp.gt.f32.partialorder %v2382, 20.0
      %vm2479 = vcmp.gt.f32.partialorder %v2383, 20.0
      %vm2480 = vcmp.gt.f32.partialorder %v2384, 20.0
      %vm2481 = vcmp.gt.f32.partialorder %v2385, 20.0
      %vm2482 = vcmp.gt.f32.partialorder %v2386, 20.0
      %vm2483 = vcmp.gt.f32.partialorder %v2387, 20.0
      %v2484 = vadd.f32 %v2452, 2.0
      %v2485 = vadd.f32 %v2453, 2.0
      %v2486 = vadd.f32 %v2454, 2.0
      %v2487 = vadd.f32 %v2455, 2.0
      %v2488 = vadd.f32 %v2456, 2.0
      %v2489 = vadd.f32 %v2457, 2.0
      %v2490 = vadd.f32 %v2458, 2.0
      %v2491 = vadd.f32 %v2459, 2.0
      %v2492 = vadd.f32 %v2460, 2.0
      %v2493 = vadd.f32 %v2461, 2.0
      %v2494 = vadd.f32 %v2462, 2.0
      %v2495 = vadd.f32 %v2463, 2.0
      %v2496 = vadd.f32 %v2464, 2.0
      %v2497 = vadd.f32 %v2465, 2.0
      %v2498 = vadd.f32 %v2466, 2.0
      %v2499 = vadd.f32 %v2467, 2.0
      %v2500 = vrcp.pop %v2484
      %v2501 = vmul.f32 %v2452, %v2500
      %v2502 = vrcp.pop %v2485
      %v2503 = vmul.f32 %v2453, %v2502
      %v2504 = vrcp.pop %v2486
      %v2505 = vmul.f32 %v2454, %v2504
      %v2506 = vrcp.pop %v2487
      %v2507 = vmul.f32 %v2455, %v2506
      %v2508 = vrcp.pop %v2488
      %v2509 = vmul.f32 %v2456, %v2508
      %v2510 = vrcp.pop %v2489
      %v2511 = vmul.f32 %v2457, %v2510
      %v2512 = vrcp.pop %v2490
      %v2513 = vmul.f32 %v2458, %v2512
      %v2514 = vrcp.pop %v2491
      %v2515 = vmul.f32 %v2459, %v2514
      %v2516 = vrcp.pop %v2492
      %v2517 = vmul.f32 %v2460, %v2516
      %v2518 = vrcp.pop %v2493
      %v2519 = vmul.f32 %v2461, %v2518
      %v2520 = vrcp.pop %v2494
      %v2521 = vmul.f32 %v2462, %v2520
      %v2522 = vrcp.pop %v2495
      %v2523 = vmul.f32 %v2463, %v2522
      %v2524 = vrcp.pop %v2496
      %v2525 = vmul.f32 %v2464, %v2524
      %v2526 = vrcp.pop %v2497
      %v2527 = vmul.f32 %v2465, %v2526
      %v2528 = vrcp.pop %v2498
      %v2529 = vmul.f32 %v2466, %v2528
      %v2530 = vrcp.pop %v2499
      %v2531 = vmul.f32 %v2467, %v2530
      %v2532 = vmul.f32 %v2372, %v2501
      %v2533 = vmul.f32 %v2373, %v2503
      %v2534 = vmul.f32 %v2374, %v2505
      %v2535 = vmul.f32 %v2375, %v2507
      %v2536 = vmul.f32 %v2376, %v2509
      %v2537 = vmul.f32 %v2377, %v2511
      %v2538 = vmul.f32 %v2378, %v2513
      %v2539 = vmul.f32 %v2379, %v2515
      %v2540 = vmul.f32 %v2380, %v2517
      %v2541 = vmul.f32 %v2381, %v2519
      %v2542 = vmul.f32 %v2382, %v2521
      %v2543 = vmul.f32 %v2383, %v2523
      %v2544 = vmul.f32 %v2384, %v2525
      %v2545 = vmul.f32 %v2385, %v2527
      %v2546 = vmul.f32 %v2386, %v2529
      %v2547 = vmul.f32 %v2387, %v2531
      %v2548 = vsel %vm2468, %v2372, %v2532
      %v2549 = vsel %vm2469, %v2373, %v2533
      %v2550 = vsel %vm2470, %v2374, %v2534
      %v2551 = vsel %vm2471, %v2375, %v2535
      %v2552 = vsel %vm2472, %v2376, %v2536
      %v2553 = vsel %vm2473, %v2377, %v2537
      %v2554 = vsel %vm2474, %v2378, %v2538
      %v2555 = vsel %vm2475, %v2379, %v2539
      %v2556 = vsel %vm2476, %v2380, %v2540
      %v2557 = vsel %vm2477, %v2381, %v2541
      %v2558 = vsel %vm2478, %v2382, %v2542
      %v2559 = vsel %vm2479, %v2383, %v2543
      %v2560 = vsel %vm2480, %v2384, %v2544
      %v2561 = vsel %vm2481, %v2385, %v2545
      %v2562 = vsel %vm2482, %v2386, %v2546
      %v2563 = vsel %vm2483, %v2387, %v2547
      %2564 = vst.msk [vmem:[%s280] sm:$0xff] %vm2090, %v2548
      %2565 = vst.msk [vmem:[%s280 + $0x8] sm:$0xff] %vm2090, %v2549
      %2566 = vst.msk [vmem:[%s280 + $0x10] sm:$0xff] %vm2090, %v2550
      %2567 = vst.msk [vmem:[%s280 + $0x18] sm:$0xff] %vm2090, %v2551
      %2568 = vst.msk [vmem:[%s280 + $0x20] sm:$0xff] %vm2090, %v2552
      %2569 = vst.msk [vmem:[%s280 + $0x28] sm:$0xff] %vm2090, %v2553
      %2570 = vst.msk [vmem:[%s280 + $0x30] sm:$0xff] %vm2090, %v2554
      %2571 = vst.msk [vmem:[%s280 + $0x38] sm:$0xff] %vm2090, %v2555
      %2572 = vst.msk [vmem:[%s280 + $0x40] sm:$0xff] %vm2090, %v2556
      %2573 = vst.msk [vmem:[%s280 + $0x48] sm:$0xff] %vm2090, %v2557
      %2574 = vst.msk [vmem:[%s280 + $0x50] sm:$0xff] %vm2090, %v2558
      %2575 = vst.msk [vmem:[%s280 + $0x58] sm:$0xff] %vm2090, %v2559
      %2576 = vst.msk [vmem:[%s280 + $0x60] sm:$0xff] %vm2090, %v2560
      %2577 = vst.msk [vmem:[%s280 + $0x68] sm:$0xff] %vm2090, %v2561
      %2578 = vst.msk [vmem:[%s280 + $0x70] sm:$0xff] %vm2090, %v2562
      %2579 = vst.msk [vmem:[%s280 + $0x78] sm:$0xff] %vm2090, %v2563
      %s2580 = smul.u32 16, %s18
      %p2581 = scmp.lt.s32.totalorder %s2580, 31
      %s2582 = scalar_select %p2581, %s2580, 31
      %s2583 = smul.addr %s2582, 8
      %s2584 = scalar_lea.vmem %s7, %s2583
      // Predicated region
      $region49: #{tpu_custom_call.1} parent=47 // pred_check
        %p2585 = pneg %p188
      $region50: #{tpu_custom_call.1} parent=47 // pred_check_branch
        %2587 = sbr.rel (%p2585) target = $region52
      $region51: #{tpu_custom_call.1} parent=47 // pred_region
        %s2588 = smul.u32 16, %s18
      $region52: #{tpu_custom_call.1} parent=47 // pred_fallthru
        _
    $region48: #{tpu_custom_call.1} parent=5 // pred_fallthru
      _
    %p2589 = scmp.le.s32.totalorder 2, %s13
    // Predicated region
    $region53: #{tpu_custom_call.1} parent=5 // pred_check
      %p2590 = pneg %p2589
    $region54: #{tpu_custom_call.1} parent=5 // pred_check_branch
      %2592 = sbr.rel (%p2590) target = $region56
    $region55: #{tpu_custom_call.1} parent=5 // pred_region
      %s2593 = ssub.s32 %s13, 2
      // Predicated region
      $region57: #{tpu_custom_call.1} parent=55 // pred_check
        %p2594 = pneg %p194
      $region58: #{tpu_custom_call.1} parent=55 // pred_check_branch
        %2596 = sbr.rel (%p2594) target = $region60
      $region59: #{tpu_custom_call.1} parent=55 // pred_region
        %s2597 = smul.u32 16, %s19
        %p2598 = scmp.lt.s32.totalorder %s2597, 31
        %s2599 = scalar_select %p2598, %s2597, 31
        %s2600 = smul.addr %s2599, 8
        %s2601 = scalar_lea.vmem %s7, %s2600
      $region60: #{tpu_custom_call.1} parent=55 // pred_fallthru
        _
    $region56: #{tpu_custom_call.1} parent=5 // pred_fallthru
      _
  $region6: #{tpu_custom_call.1} parent=0 // loop_footer
    %s17 = sadd.s32 1, %s13
  $region7: #{tpu_custom_call.1} parent=0 // loop_footer_branch
    %12 = sbr.rel target = $region3
  $region8: #{tpu_custom_call.1} parent=0 // loop_exit
    _

</llo_original>
